<compile_context>
chip_gen: v7x
topology: tpu7x:2x2x1
jax: 0.10.0
libtpu: 0.0.40
codegen_flags: <defaults>
</compile_context>

<pallas_src>
import math
import functools

import jax
import jax.numpy as jnp
from jax import lax
from jax.experimental import pallas as pl
from jax.experimental.pallas import tpu as pltpu


def _layer_norm(x, gamma, beta, eps=1e-5):
    # PyTorch nn.LayerNorm semantics (biased variance, eps=1e-5).
    mu = jnp.mean(x, axis=-1, keepdims=True)
    var = jnp.mean((x - mu) ** 2, axis=-1, keepdims=True)
    return (x - mu) * lax.rsqrt(var + eps) * gamma + beta


def _masked_softmax(vec, mask):
    # Exact semantics of ModelComponents.masked_softmax (dim = last).
    masked_vec = vec * mask
    max_vec = jnp.max(masked_vec, axis=-1, keepdims=True)
    exps = jnp.exp(masked_vec - max_vec)
    masked_exps = exps * mask
    masked_sums = jnp.sum(masked_exps, axis=-1, keepdims=True)
    masked_sums = masked_sums + (masked_sums == 0).astype(masked_sums.dtype)
    return masked_exps / (masked_sums + 1e-20)


def _mha_kernel(rep_ref, dir_ref, adis_ref, q_ref, k_ref, v_ref,
                wq_ref, wk_ref, wv_ref, mavg_ref, g1_ref, b1_ref,
                wp_ref, bp_ref, g2_ref, b2_ref, out_ref,
                *, head_count, head_dim, inv_scale, compute_dtype, eps=1e-5):
    L = q_ref.shape[1]

    q = q_ref[0]                      # (L, D) in compute_dtype
    k = k_ref[0]
    v = v_ref[0]

    # --- Fused per-head projections: one (L,D)@(D,H*Dk) matmul each ---------
    qw = jnp.dot(q, wq_ref[...], preferred_element_type=jnp.float32)   # (L, H*Dk)
    kw = jnp.dot(k, wk_ref[...], preferred_element_type=jnp.float32)
    vw = jnp.dot(v, wv_ref[...], preferred_element_type=jnp.float32)

    # --- Per-head LayerNorm(Dk), lane-dense via block-diag averaging matmul -
    mavg = mavg_ref[...]              # (H*Dk, H*Dk), f32 block-diag of 1/Dk
    g1 = g1_ref[...]                  # (1, H*Dk) gamma tiled per head
    b1 = b1_ref[...]

    def blockwise_layer_norm(x):
        mu = jnp.dot(x, mavg, preferred_element_type=jnp.float32)
        var = jnp.dot((x - mu) ** 2, mavg, preferred_element_type=jnp.float32)
        return (x - mu) * lax.rsqrt(var + eps) * g1 + b1

    qw = blockwise_layer_norm(qw)
    kw = blockwise_layer_norm(kw)
    vw = blockwise_layer_norm(vw)

    # --- Masks (dir / alpha*dis are precomputed, VMEM-resident constants) ---
    dir_mask = dir_ref[...]           # (L, L) f32
    adis = adis_ref[...]              # (L, L) f32, == alpha * (-|i-j|)
    rep_row = jnp.broadcast_to(rep_ref[0], (L, L))       # rep_row[i, j] = rep[j]
    rep_mat = rep_row * jnp.transpose(rep_row)           # rep[i] * rep[j]
    mask = rep_mat * dir_mask

    # --- Per-head attention; head outputs gathered into one lane-dense slab -
    # head_count is small here so a static Python loop is fine; for large H
    # convert to lax.fori_loop(..., unroll=True) to bound vreg live ranges.
    outs = []
    for h in range(head_count):
        sl = slice(h * head_dim, (h + 1) * head_dim)
        qh = qw[:, sl].astype(compute_dtype)
        kh = kw[:, sl].astype(compute_dtype)
        vh = vw[:, sl].astype(compute_dtype)

        att = lax.dot_general(qh, kh, (((1,), (1,)), ((), ())),
                              preferred_element_type=jnp.float32) * inv_scale
        att = att + adis

        # Exact masked_softmax semantics; normalization via EUP reciprocal.
        mv = att * mask
        mx = jnp.max(mv, axis=-1, keepdims=True)
        ex = jnp.exp(mv - mx) * mask
        s = jnp.sum(ex, axis=-1, keepdims=True)
        s = s + (s == 0).astype(jnp.float32)
        att = ex * pl.reciprocal(s + 1e-20, approx=False)

        outs.append(jnp.dot(att.astype(compute_dtype), vh,
                            preferred_element_type=jnp.float32))

    cat = jnp.concatenate(outs, axis=-1)                 # (L, H*Dk), f32

    # --- Fused output projection: single (L,H*Dk)@(H*Dk,D) matmul -----------
    wp = wp_ref[...]
    proj = jnp.dot(cat.astype(wp.dtype), wp, preferred_element_type=jnp.float32)
    proj = proj + bp_ref[...]

    # --- Final LayerNorm over the model dim ----------------------------------
    mu = jnp.mean(proj, axis=-1, keepdims=True)
    var = jnp.mean((proj - mu) ** 2, axis=-1, keepdims=True)
    out = (proj - mu) * lax.rsqrt(var + eps) * g2_ref[...] + b2_ref[...]

    # TODO(synk): nn.Dropout is identity in eval mode; training-mode dropout
    # is not applied here.
    out_ref[0] = out.astype(out_ref.dtype)


def masked_multihead_attention(q, k, v, rep_mask, w_q, w_k, w_v, ln1_g, ln1_b,
                               w_proj, b_proj, ln2_g, ln2_b,
                               *, head_count, alpha, direction,
                               compute_dtype=jnp.float32):
    B, L, D = q.shape
    Dk = w_q.shape[-1]
    HD = head_count * Dk

    # Fused projection slabs: column block h of the slab equals w_*[h].
    wq_slab = jnp.transpose(w_q, (1, 0, 2)).reshape(D, HD)
    wk_slab = jnp.transpose(w_k, (1, 0, 2)).reshape(D, HD)
    wv_slab = jnp.transpose(w_v, (1, 0, 2)).reshape(D, HD)

    # Output projection pre-transposed so the kernel computes x @ W^T + b.
    wp_t = jnp.transpose(w_proj)                         # (H*Dk, D)
    bp = b_proj.reshape(1, D)

    # Per-head LayerNorm params tiled lane-dense + block-diag averaging matrix.
    g1 = jnp.tile(ln1_g.reshape(1, Dk), (1, head_count)).astype(jnp.float32)
    b1 = jnp.tile(ln1_b.reshape(1, Dk), (1, head_count)).astype(jnp.float32)
    mavg = jnp.kron(jnp.eye(head_count, dtype=jnp.float32),
                    jnp.full((Dk, Dk), 1.0 / Dk, dtype=jnp.float32))
    g2 = ln2_g.reshape(1, D).astype(jnp.float32)
    b2 = ln2_b.reshape(1, D).astype(jnp.float32)

    # Batch-independent masks precomputed once (constant index_map below).
    idx = jnp.arange(L)
    row, col = idx[:, None], idx[None, :]
    if direction == 'fw':
        dir_mask = (col < row).astype(jnp.float32)       # torch.tril(diag=-1)
    else:
        dir_mask = (col > row).astype(jnp.float32)       # torch.triu(diag=+1)
    adis = (-float(alpha)) * jnp.abs(row - col).astype(jnp.float32)

    rep_row = rep_mask.reshape(B, 1, L).astype(jnp.float32)

    # MXU operands in compute_dtype (bf16 recommended on v6e/v7x; f32 accum).
    qc = q.astype(compute_dtype)
    kc = k.astype(compute_dtype)
    vc = v.astype(compute_dtype)
    wq_slab = wq_slab.astype(compute_dtype)
    wk_slab = wk_slab.astype(compute_dtype)
    wv_slab = wv_slab.astype(compute_dtype)
    wp_c = wp_t.astype(compute_dtype)

    kernel = functools.partial(
        _mha_kernel, head_count=head_count, head_dim=Dk,
        inv_scale=1.0 / math.sqrt(D), compute_dtype=compute_dtype)

    # Weights / masks use a constant index_map so they stay VMEM-resident
    # across the batch grid.  Block shapes equal full array dims, satisfying
    # the (8,128) rule; note that for a real model with D < 128 one would pad
    # the output lane dim to 128 to avoid masked partial stores.
    grid_spec = pltpu.PrefetchScalarGridSpec(
        num_scalar_prefetch=0,
        grid=(B,),
        in_specs=[
            pl.BlockSpec((1, 1, L), lambda b: (b, 0, 0)),         # rep (row view)
            pl.BlockSpec((L, L), lambda b: (0, 0)),               # dir_mask
            pl.BlockSpec((L, L), lambda b: (0, 0)),               # alpha*dis_mask
            pl.BlockSpec((1, L, D), lambda b: (b, 0, 0)),         # q
            pl.BlockSpec((1, L, D), lambda b: (b, 0, 0)),         # k
            pl.BlockSpec((1, L, D), lambda b: (b, 0, 0)),         # v
            pl.BlockSpec((D, HD), lambda b: (0, 0)),              # w_q slab
            pl.BlockSpec((D, HD), lambda b: (0, 0)),              # w_k slab
            pl.BlockSpec((D, HD), lambda b: (0, 0)),              # w_v slab
            pl.BlockSpec((HD, HD), lambda b: (0, 0)),             # block-diag avg
            pl.BlockSpec((1, HD), lambda b: (0, 0)),              # LN1 gamma (tiled)
            pl.BlockSpec((1, HD), lambda b: (0, 0)),              # LN1 beta (tiled)
            pl.BlockSpec((HD, D), lambda b: (0, 0)),              # proj weight^T
            pl.BlockSpec((1, D), lambda b: (0, 0)),               # proj bias
            pl.BlockSpec((1, D), lambda b: (0, 0)),               # LN2 gamma
            pl.BlockSpec((1, D), lambda b: (0, 0)),               # LN2 beta
        ],
        out_specs=pl.BlockSpec((1, L, D), lambda b: (b, 0, 0)),
    )

    return pl.pallas_call(
        kernel,
        out_shape=jax.ShapeDtypeStruct((B, L, D), jnp.float32),
        grid_spec=grid_spec,
        compiler_params=pltpu.CompilerParams(dimension_semantics=("parallel",)),
    )(rep_row, dir_mask, adis, qc, kc, vc, wq_slab, wk_slab, wv_slab,
      mavg, g1, b1, wp_c, bp, g2, b2)


def reference_forward(q, k, v, rep_mask, w_q, w_k, w_v, ln1_g, ln1_b,
                      w_proj, b_proj, ln2_g, ln2_b, *, head_count, alpha, direction):
    # Pure-JAX mirror of the PyTorch forward (for verification only).
    B, L, D = q.shape
    Dk = w_q.shape[-1]
    scale = math.sqrt(D)
    qw = _layer_norm(jnp.einsum('bld,hdk->hblk', q, w_q), ln1_g, ln1_b)
    kw = _layer_norm(jnp.einsum('bld,hdk->hblk', k, w_k), ln1_g, ln1_b)
    vw = _layer_norm(jnp.einsum('bld,hdk->hblk', v, w_v), ln1_g, ln1_b)
    idx = jnp.arange(L)
    row, col = idx[:, None], idx[None, :]
    dir_mask = (col < row).astype(jnp.float32) if direction == 'fw' \
        else (col > row).astype(jnp.float32)
    dis_mask = -jnp.abs(row - col).astype(jnp.float32)
    rep = rep_mask.reshape(B, L)
    rep_mat = rep[:, :, None] * rep[:, None, :]
    mask = (rep_mat * dir_mask)[None]                 # (1, B, L, L)
    att = jnp.einsum('hbqd,hbkd->hbqk', qw, kw) / scale
    att = att + alpha * dis_mask
    att = _masked_softmax(att, mask)
    outs = jnp.einsum('hbqk,hbkd->hbqd', att, vw)     # (H, B, L, Dv)
    cat = jnp.transpose(outs, (1, 2, 0, 3)).reshape(B, L, head_count * Dk)
    proj = cat @ w_proj.T + b_proj
    return _layer_norm(proj, ln2_g, ln2_b)


if __name__ == "__main__":
    B, L, D, H = 2, 8, 32, 4
    Dk = D // H
    alpha = 1.5
    direction = 'fw'

    key = jax.random.PRNGKey(0)
    kq, kk, kv, kwq, kwk, kwv, kwp, kbp = jax.random.split(key, 8)

    # xavier_normal_ on (H, D, Dk): fan_in = D*Dk, fan_out = H*Dk
    std = math.sqrt(2.0 / (D * Dk + H * Dk))
    w_q = std * jax.random.normal(kwq, (H, D, Dk), jnp.float32)
    w_k = std * jax.random.normal(kwk, (H, D, Dk), jnp.float32)
    w_v = std * jax.random.normal(kwv, (H, D, Dk), jnp.float32)
    w_proj = (1.0 / math.sqrt(D)) * jax.random.normal(kwp, (D, D), jnp.float32)  # (out, in)
    b_proj = 0.01 * jax.random.normal(kbp, (D,), jnp.float32)
    ln1_g = jnp.ones((1, Dk), jnp.float32)
    ln1_b = jnp.zeros((1, Dk), jnp.float32)
    ln2_g = jnp.ones((1, D), jnp.float32)
    ln2_b = jnp.zeros((1, D), jnp.float32)

    q = jax.random.normal(kq, (B, L, D), jnp.float32)
    k = jax.random.normal(kk, (B, L, D), jnp.float32)
    v = jax.random.normal(kv, (B, L, D), jnp.float32)
    lengths = jnp.array([L, 5])
    rep_mask = (jnp.arange(L)[None, :] < lengths[:, None]).astype(jnp.float32).reshape(B, L, 1)

    ref = reference_forward(q, k, v, rep_mask, w_q, w_k, w_v,
                            ln1_g, ln1_b, w_proj, b_proj, ln2_g, ln2_b,
                            head_count=H, alpha=alpha, direction=direction)

    # f32 MXU path: bit-faithful check against the reference.
    out = masked_multihead_attention(q, k, v, rep_mask, w_q, w_k, w_v,
                                     ln1_g, ln1_b, w_proj, b_proj, ln2_g, ln2_b,
                                     head_count=H, alpha=alpha, direction=direction,
                                     compute_dtype=jnp.float32)
    out = jax.block_until_ready(out)
    assert out.shape == (B, L, D)
    assert jnp.allclose(out, ref, atol=1e-4, rtol=1e-4), float(jnp.max(jnp.abs(out - ref)))

    # bf16 MXU path (production setting for v6e/v7x): f32 accumulation, loose check.
    out_bf16 = masked_multihead_attention(q, k, v, rep_mask, w_q, w_k, w_v,
                                          ln1_g, ln1_b, w_proj, b_proj, ln2_g, ln2_b,
                                          head_count=H, alpha=alpha, direction=direction,
                                          compute_dtype=jnp.bfloat16)
    out_bf16 = jax.block_until_ready(out_bf16)
    assert bool(jnp.isfinite(out_bf16).all())
    assert float(jnp.max(jnp.abs(out_bf16 - ref))) < 0.3

    print("KERNEL_OK")
</pallas_src>

<mosaic_0001>
module attributes {stable_mosaic.version = 11 : i64} {
  func.func @_mha_kernel(%arg0: i32, %arg1: memref<1x1x8xf32, #tpu.memory_space<vmem>>, %arg2: memref<8x8xf32, #tpu.memory_space<vmem>>, %arg3: memref<8x8xf32, #tpu.memory_space<vmem>>, %arg4: memref<1x8x32xf32, #tpu.memory_space<vmem>>, %arg5: memref<1x8x32xf32, #tpu.memory_space<vmem>>, %arg6: memref<1x8x32xf32, #tpu.memory_space<vmem>>, %arg7: memref<32x32xf32, #tpu.memory_space<vmem>>, %arg8: memref<32x32xf32, #tpu.memory_space<vmem>>, %arg9: memref<32x32xf32, #tpu.memory_space<vmem>>, %arg10: memref<32x32xf32, #tpu.memory_space<vmem>>, %arg11: memref<1x32xf32, #tpu.memory_space<vmem>>, %arg12: memref<1x32xf32, #tpu.memory_space<vmem>>, %arg13: memref<32x32xf32, #tpu.memory_space<vmem>>, %arg14: memref<1x32xf32, #tpu.memory_space<vmem>>, %arg15: memref<1x32xf32, #tpu.memory_space<vmem>>, %arg16: memref<1x32xf32, #tpu.memory_space<vmem>>, %arg17: memref<1x8x32xf32, #tpu.memory_space<vmem>>) attributes {dimension_semantics = [#tpu.dimension_semantics<parallel>], iteration_bounds = array<i64: 2>, scalar_prefetch = 0 : i64, scratch_operands = 0 : i64, tpu.core_type = #tpu.core_type<tc>, window_params = [{transform_indices = @transform_0, window_bounds = array<i64: 1, 1, 8>}, {pipeline_mode = #tpu.pipeline_mode<synchronous>, transform_indices = @transform_1, window_bounds = array<i64: 8, 8>}, {pipeline_mode = #tpu.pipeline_mode<synchronous>, transform_indices = @transform_2, window_bounds = array<i64: 8, 8>}, {transform_indices = @transform_3, window_bounds = array<i64: 1, 8, 32>}, {transform_indices = @transform_4, window_bounds = array<i64: 1, 8, 32>}, {transform_indices = @transform_5, window_bounds = array<i64: 1, 8, 32>}, {pipeline_mode = #tpu.pipeline_mode<synchronous>, transform_indices = @transform_6, window_bounds = array<i64: 32, 32>}, {pipeline_mode = #tpu.pipeline_mode<synchronous>, transform_indices = @transform_7, window_bounds = array<i64: 32, 32>}, {pipeline_mode = #tpu.pipeline_mode<synchronous>, transform_indices = @transform_8, window_bounds = array<i64: 32, 32>}, {pipeline_mode = #tpu.pipeline_mode<synchronous>, transform_indices = @transform_9, window_bounds = array<i64: 32, 32>}, {pipeline_mode = #tpu.pipeline_mode<synchronous>, transform_indices = @transform_10, window_bounds = array<i64: 1, 32>}, {pipeline_mode = #tpu.pipeline_mode<synchronous>, transform_indices = @transform_11, window_bounds = array<i64: 1, 32>}, {pipeline_mode = #tpu.pipeline_mode<synchronous>, transform_indices = @transform_12, window_bounds = array<i64: 32, 32>}, {pipeline_mode = #tpu.pipeline_mode<synchronous>, transform_indices = @transform_13, window_bounds = array<i64: 1, 32>}, {pipeline_mode = #tpu.pipeline_mode<synchronous>, transform_indices = @transform_14, window_bounds = array<i64: 1, 32>}, {pipeline_mode = #tpu.pipeline_mode<synchronous>, transform_indices = @transform_15, window_bounds = array<i64: 1, 32>}, {transform_indices = @transform_16, window_bounds = array<i64: 1, 8, 32>}]} {
    %c0 = arith.constant 0 : index
    %c0_0 = arith.constant 0 : index
    %c0_1 = arith.constant 0 : index
    %0 = vector.load %arg4[%c0, %c0_0, %c0_1] : memref<1x8x32xf32, #tpu.memory_space<vmem>>, vector<1x8x32xf32>
    %1 = vector.shape_cast %0 : vector<1x8x32xf32> to vector<8x32xf32>
    %c0_2 = arith.constant 0 : index
    %c0_3 = arith.constant 0 : index
    %c0_4 = arith.constant 0 : index
    %2 = vector.load %arg5[%c0_2, %c0_3, %c0_4] : memref<1x8x32xf32, #tpu.memory_space<vmem>>, vector<1x8x32xf32>
    %3 = vector.shape_cast %2 : vector<1x8x32xf32> to vector<8x32xf32>
    %c0_5 = arith.constant 0 : index
    %c0_6 = arith.constant 0 : index
    %c0_7 = arith.constant 0 : index
    %4 = vector.load %arg6[%c0_5, %c0_6, %c0_7] : memref<1x8x32xf32, #tpu.memory_space<vmem>>, vector<1x8x32xf32>
    %5 = vector.shape_cast %4 : vector<1x8x32xf32> to vector<8x32xf32>
    %c0_8 = arith.constant 0 : index
    %c0_9 = arith.constant 0 : index
    %6 = vector.load %arg7[%c0_8, %c0_9] : memref<32x32xf32, #tpu.memory_space<vmem>>, vector<32x32xf32>
    %cst = arith.constant dense<0.000000e+00> : vector<8x32xf32>
    %7 = tpu.matmul %1, %6, %cst {dimension_numbers = #tpu.dot_dimension_numbers<[1], [0], [0], [1], [0, 0, 1, 1], [], []>} : vector<8x32xf32>, vector<32x32xf32>, vector<8x32xf32> -> vector<8x32xf32>
    %c0_10 = arith.constant 0 : index
    %c0_11 = arith.constant 0 : index
    %8 = vector.load %arg8[%c0_10, %c0_11] : memref<32x32xf32, #tpu.memory_space<vmem>>, vector<32x32xf32>
    %cst_12 = arith.constant dense<0.000000e+00> : vector<8x32xf32>
    %9 = tpu.matmul %3, %8, %cst_12 {dimension_numbers = #tpu.dot_dimension_numbers<[1], [0], [0], [1], [0, 0, 1, 1], [], []>} : vector<8x32xf32>, vector<32x32xf32>, vector<8x32xf32> -> vector<8x32xf32>
    %c0_13 = arith.constant 0 : index
    %c0_14 = arith.constant 0 : index
    %10 = vector.load %arg9[%c0_13, %c0_14] : memref<32x32xf32, #tpu.memory_space<vmem>>, vector<32x32xf32>
    %cst_15 = arith.constant dense<0.000000e+00> : vector<8x32xf32>
    %11 = tpu.matmul %5, %10, %cst_15 {dimension_numbers = #tpu.dot_dimension_numbers<[1], [0], [0], [1], [0, 0, 1, 1], [], []>} : vector<8x32xf32>, vector<32x32xf32>, vector<8x32xf32> -> vector<8x32xf32>
    %c0_16 = arith.constant 0 : index
    %c0_17 = arith.constant 0 : index
    %12 = vector.load %arg10[%c0_16, %c0_17] : memref<32x32xf32, #tpu.memory_space<vmem>>, vector<32x32xf32>
    %c0_18 = arith.constant 0 : index
    %c0_19 = arith.constant 0 : index
    %13 = vector.load %arg11[%c0_18, %c0_19] : memref<1x32xf32, #tpu.memory_space<vmem>>, vector<1x32xf32>
    %c0_20 = arith.constant 0 : index
    %c0_21 = arith.constant 0 : index
    %14 = vector.load %arg12[%c0_20, %c0_21] : memref<1x32xf32, #tpu.memory_space<vmem>>, vector<1x32xf32>
    %cst_22 = arith.constant dense<0.000000e+00> : vector<8x32xf32>
    %15 = tpu.matmul %7, %12, %cst_22 {dimension_numbers = #tpu.dot_dimension_numbers<[1], [0], [0], [1], [0, 0, 1, 1], [], []>} : vector<8x32xf32>, vector<32x32xf32>, vector<8x32xf32> -> vector<8x32xf32>
    %16 = arith.subf %7, %15 : vector<8x32xf32>
    %17 = arith.mulf %16, %16 : vector<8x32xf32>
    %cst_23 = arith.constant dense<0.000000e+00> : vector<8x32xf32>
    %18 = tpu.matmul %17, %12, %cst_23 {dimension_numbers = #tpu.dot_dimension_numbers<[1], [0], [0], [1], [0, 0, 1, 1], [], []>} : vector<8x32xf32>, vector<32x32xf32>, vector<8x32xf32> -> vector<8x32xf32>
    %19 = arith.subf %7, %15 : vector<8x32xf32>
    %cst_24 = arith.constant 9.99999974E-6 : f32
    %20 = vector.broadcast %cst_24 : f32 to vector<8x32xf32>
    %21 = arith.addf %18, %20 : vector<8x32xf32>
    %22 = math.rsqrt %21 : vector<8x32xf32>
    %23 = arith.mulf %19, %22 : vector<8x32xf32>
    %24 = vector.broadcast %13 : vector<1x32xf32> to vector<8x32xf32>
    %25 = arith.mulf %23, %24 : vector<8x32xf32>
    %26 = vector.broadcast %14 : vector<1x32xf32> to vector<8x32xf32>
    %27 = arith.addf %25, %26 : vector<8x32xf32>
    %cst_25 = arith.constant dense<0.000000e+00> : vector<8x32xf32>
    %28 = tpu.matmul %9, %12, %cst_25 {dimension_numbers = #tpu.dot_dimension_numbers<[1], [0], [0], [1], [0, 0, 1, 1], [], []>} : vector<8x32xf32>, vector<32x32xf32>, vector<8x32xf32> -> vector<8x32xf32>
    %29 = arith.subf %9, %28 : vector<8x32xf32>
    %30 = arith.mulf %29, %29 : vector<8x32xf32>
    %cst_26 = arith.constant dense<0.000000e+00> : vector<8x32xf32>
    %31 = tpu.matmul %30, %12, %cst_26 {dimension_numbers = #tpu.dot_dimension_numbers<[1], [0], [0], [1], [0, 0, 1, 1], [], []>} : vector<8x32xf32>, vector<32x32xf32>, vector<8x32xf32> -> vector<8x32xf32>
    %32 = arith.subf %9, %28 : vector<8x32xf32>
    %cst_27 = arith.constant 9.99999974E-6 : f32
    %33 = vector.broadcast %cst_27 : f32 to vector<8x32xf32>
    %34 = arith.addf %31, %33 : vector<8x32xf32>
    %35 = math.rsqrt %34 : vector<8x32xf32>
    %36 = arith.mulf %32, %35 : vector<8x32xf32>
    %37 = vector.broadcast %13 : vector<1x32xf32> to vector<8x32xf32>
    %38 = arith.mulf %36, %37 : vector<8x32xf32>
    %39 = vector.broadcast %14 : vector<1x32xf32> to vector<8x32xf32>
    %40 = arith.addf %38, %39 : vector<8x32xf32>
    %cst_28 = arith.constant dense<0.000000e+00> : vector<8x32xf32>
    %41 = tpu.matmul %11, %12, %cst_28 {dimension_numbers = #tpu.dot_dimension_numbers<[1], [0], [0], [1], [0, 0, 1, 1], [], []>} : vector<8x32xf32>, vector<32x32xf32>, vector<8x32xf32> -> vector<8x32xf32>
    %42 = arith.subf %11, %41 : vector<8x32xf32>
    %43 = arith.mulf %42, %42 : vector<8x32xf32>
    %cst_29 = arith.constant dense<0.000000e+00> : vector<8x32xf32>
    %44 = tpu.matmul %43, %12, %cst_29 {dimension_numbers = #tpu.dot_dimension_numbers<[1], [0], [0], [1], [0, 0, 1, 1], [], []>} : vector<8x32xf32>, vector<32x32xf32>, vector<8x32xf32> -> vector<8x32xf32>
    %45 = arith.subf %11, %41 : vector<8x32xf32>
    %cst_30 = arith.constant 9.99999974E-6 : f32
    %46 = vector.broadcast %cst_30 : f32 to vector<8x32xf32>
    %47 = arith.addf %44, %46 : vector<8x32xf32>
    %48 = math.rsqrt %47 : vector<8x32xf32>
    %49 = arith.mulf %45, %48 : vector<8x32xf32>
    %50 = vector.broadcast %13 : vector<1x32xf32> to vector<8x32xf32>
    %51 = arith.mulf %49, %50 : vector<8x32xf32>
    %52 = vector.broadcast %14 : vector<1x32xf32> to vector<8x32xf32>
    %53 = arith.addf %51, %52 : vector<8x32xf32>
    %c0_31 = arith.constant 0 : index
    %c0_32 = arith.constant 0 : index
    %54 = vector.load %arg2[%c0_31, %c0_32] : memref<8x8xf32, #tpu.memory_space<vmem>>, vector<8x8xf32>
    %c0_33 = arith.constant 0 : index
    %c0_34 = arith.constant 0 : index
    %55 = vector.load %arg3[%c0_33, %c0_34] : memref<8x8xf32, #tpu.memory_space<vmem>>, vector<8x8xf32>
    %c0_35 = arith.constant 0 : index
    %c0_36 = arith.constant 0 : index
    %c0_37 = arith.constant 0 : index
    %56 = vector.load %arg1[%c0_35, %c0_36, %c0_37] : memref<1x1x8xf32, #tpu.memory_space<vmem>>, vector<1x1x8xf32>
    %57 = vector.shape_cast %56 : vector<1x1x8xf32> to vector<1x8xf32>
    %58 = vector.shape_cast %57 : vector<1x8xf32> to vector<1x8xf32>
    %59 = vector.broadcast %58 : vector<1x8xf32> to vector<8x8xf32>
    %60 = tpu.transpose %59, [1, 0] : vector<8x8xf32> -> vector<8x8xf32>
    %61 = arith.mulf %59, %60 : vector<8x8xf32>
    %62 = arith.mulf %61, %54 : vector<8x8xf32>
    %63 = vector.extract_strided_slice %27 {offsets = [0, 0], sizes = [8, 8], strides = [1, 1]} : vector<8x32xf32> to vector<8x8xf32>
    %64 = vector.extract_strided_slice %40 {offsets = [0, 0], sizes = [8, 8], strides = [1, 1]} : vector<8x32xf32> to vector<8x8xf32>
    %65 = vector.extract_strided_slice %53 {offsets = [0, 0], sizes = [8, 8], strides = [1, 1]} : vector<8x32xf32> to vector<8x8xf32>
    %cst_38 = arith.constant dense<0.000000e+00> : vector<8x8xf32>
    %66 = tpu.matmul %63, %64, %cst_38 {dimension_numbers = #tpu.dot_dimension_numbers<[1], [1], [0], [0], [0, 0, 1, 0], [], []>} : vector<8x8xf32>, vector<8x8xf32>, vector<8x8xf32> -> vector<8x8xf32>
    %cst_39 = arith.constant 0.176776692 : f32
    %67 = vector.broadcast %cst_39 : f32 to vector<8x8xf32>
    %68 = arith.mulf %66, %67 : vector<8x8xf32>
    %69 = arith.addf %68, %55 : vector<8x8xf32>
    %70 = arith.mulf %69, %62 : vector<8x8xf32>
    %cst_40 = arith.constant dense<0xFF800000> : vector<8xf32>
    %71 = vector.multi_reduction <maximumf>, %70, %cst_40 [1] : vector<8x8xf32> to vector<8xf32>
    %72 = vector.shape_cast %71 : vector<8xf32> to vector<8x1xf32>
    %73 = vector.broadcast %72 : vector<8x1xf32> to vector<8x8xf32>
    %74 = arith.subf %70, %73 : vector<8x8xf32>
    %75 = math.exp %74 : vector<8x8xf32>
    %76 = arith.mulf %75, %62 : vector<8x8xf32>
    %cst_41 = arith.constant dense<0.000000e+00> : vector<8xf32>
    %77 = vector.multi_reduction <add>, %76, %cst_41 [1] : vector<8x8xf32> to vector<8xf32>
    %78 = vector.shape_cast %77 : vector<8xf32> to vector<8x1xf32>
    %cst_42 = arith.constant 0.000000e+00 : f32
    %79 = vector.broadcast %cst_42 : f32 to vector<8x1xf32>
    %80 = arith.cmpf oeq, %78, %79 : vector<8x1xf32>
    %81 = arith.extui %80 : vector<8x1xi1> to vector<8x1xi32>
    %82 = arith.sitofp %81 : vector<8x1xi32> to vector<8x1xf32>
    %83 = arith.addf %78, %82 : vector<8x1xf32>
    %cst_43 = arith.constant 9.99999968E-21 : f32
    %84 = vector.broadcast %cst_43 : f32 to vector<8x1xf32>
    %85 = arith.addf %83, %84 : vector<8x1xf32>
    %86 = tpu.reciprocal %85 : vector<8x1xf32> -> vector<8x1xf32>
    %87 = vector.broadcast %86 : vector<8x1xf32> to vector<8x8xf32>
    %88 = arith.mulf %76, %87 : vector<8x8xf32>
    %cst_44 = arith.constant dense<0.000000e+00> : vector<8x8xf32>
    %89 = tpu.matmul %88, %65, %cst_44 {dimension_numbers = #tpu.dot_dimension_numbers<[1], [0], [0], [1], [0, 0, 1, 1], [], []>} : vector<8x8xf32>, vector<8x8xf32>, vector<8x8xf32> -> vector<8x8xf32>
    %90 = vector.extract_strided_slice %27 {offsets = [0, 8], sizes = [8, 8], strides = [1, 1]} : vector<8x32xf32> to vector<8x8xf32>
    %91 = vector.extract_strided_slice %40 {offsets = [0, 8], sizes = [8, 8], strides = [1, 1]} : vector<8x32xf32> to vector<8x8xf32>
    %92 = vector.extract_strided_slice %53 {offsets = [0, 8], sizes = [8, 8], strides = [1, 1]} : vector<8x32xf32> to vector<8x8xf32>
    %cst_45 = arith.constant dense<0.000000e+00> : vector<8x8xf32>
    %93 = tpu.matmul %90, %91, %cst_45 {dimension_numbers = #tpu.dot_dimension_numbers<[1], [1], [0], [0], [0, 0, 1, 0], [], []>} : vector<8x8xf32>, vector<8x8xf32>, vector<8x8xf32> -> vector<8x8xf32>
    %cst_46 = arith.constant 0.176776692 : f32
    %94 = vector.broadcast %cst_46 : f32 to vector<8x8xf32>
    %95 = arith.mulf %93, %94 : vector<8x8xf32>
    %96 = arith.addf %95, %55 : vector<8x8xf32>
    %97 = arith.mulf %96, %62 : vector<8x8xf32>
    %cst_47 = arith.constant dense<0xFF800000> : vector<8xf32>
    %98 = vector.multi_reduction <maximumf>, %97, %cst_47 [1] : vector<8x8xf32> to vector<8xf32>
    %99 = vector.shape_cast %98 : vector<8xf32> to vector<8x1xf32>
    %100 = vector.broadcast %99 : vector<8x1xf32> to vector<8x8xf32>
    %101 = arith.subf %97, %100 : vector<8x8xf32>
    %102 = math.exp %101 : vector<8x8xf32>
    %103 = arith.mulf %102, %62 : vector<8x8xf32>
    %cst_48 = arith.constant dense<0.000000e+00> : vector<8xf32>
    %104 = vector.multi_reduction <add>, %103, %cst_48 [1] : vector<8x8xf32> to vector<8xf32>
    %105 = vector.shape_cast %104 : vector<8xf32> to vector<8x1xf32>
    %cst_49 = arith.constant 0.000000e+00 : f32
    %106 = vector.broadcast %cst_49 : f32 to vector<8x1xf32>
    %107 = arith.cmpf oeq, %105, %106 : vector<8x1xf32>
    %108 = arith.extui %107 : vector<8x1xi1> to vector<8x1xi32>
    %109 = arith.sitofp %108 : vector<8x1xi32> to vector<8x1xf32>
    %110 = arith.addf %105, %109 : vector<8x1xf32>
    %cst_50 = arith.constant 9.99999968E-21 : f32
    %111 = vector.broadcast %cst_50 : f32 to vector<8x1xf32>
    %112 = arith.addf %110, %111 : vector<8x1xf32>
    %113 = tpu.reciprocal %112 : vector<8x1xf32> -> vector<8x1xf32>
    %114 = vector.broadcast %113 : vector<8x1xf32> to vector<8x8xf32>
    %115 = arith.mulf %103, %114 : vector<8x8xf32>
    %cst_51 = arith.constant dense<0.000000e+00> : vector<8x8xf32>
    %116 = tpu.matmul %115, %92, %cst_51 {dimension_numbers = #tpu.dot_dimension_numbers<[1], [0], [0], [1], [0, 0, 1, 1], [], []>} : vector<8x8xf32>, vector<8x8xf32>, vector<8x8xf32> -> vector<8x8xf32>
    %117 = vector.extract_strided_slice %27 {offsets = [0, 16], sizes = [8, 8], strides = [1, 1]} : vector<8x32xf32> to vector<8x8xf32>
    %118 = vector.extract_strided_slice %40 {offsets = [0, 16], sizes = [8, 8], strides = [1, 1]} : vector<8x32xf32> to vector<8x8xf32>
    %119 = vector.extract_strided_slice %53 {offsets = [0, 16], sizes = [8, 8], strides = [1, 1]} : vector<8x32xf32> to vector<8x8xf32>
    %cst_52 = arith.constant dense<0.000000e+00> : vector<8x8xf32>
    %120 = tpu.matmul %117, %118, %cst_52 {dimension_numbers = #tpu.dot_dimension_numbers<[1], [1], [0], [0], [0, 0, 1, 0], [], []>} : vector<8x8xf32>, vector<8x8xf32>, vector<8x8xf32> -> vector<8x8xf32>
    %cst_53 = arith.constant 0.176776692 : f32
    %121 = vector.broadcast %cst_53 : f32 to vector<8x8xf32>
    %122 = arith.mulf %120, %121 : vector<8x8xf32>
    %123 = arith.addf %122, %55 : vector<8x8xf32>
    %124 = arith.mulf %123, %62 : vector<8x8xf32>
    %cst_54 = arith.constant dense<0xFF800000> : vector<8xf32>
    %125 = vector.multi_reduction <maximumf>, %124, %cst_54 [1] : vector<8x8xf32> to vector<8xf32>
    %126 = vector.shape_cast %125 : vector<8xf32> to vector<8x1xf32>
    %127 = vector.broadcast %126 : vector<8x1xf32> to vector<8x8xf32>
    %128 = arith.subf %124, %127 : vector<8x8xf32>
    %129 = math.exp %128 : vector<8x8xf32>
    %130 = arith.mulf %129, %62 : vector<8x8xf32>
    %cst_55 = arith.constant dense<0.000000e+00> : vector<8xf32>
    %131 = vector.multi_reduction <add>, %130, %cst_55 [1] : vector<8x8xf32> to vector<8xf32>
    %132 = vector.shape_cast %131 : vector<8xf32> to vector<8x1xf32>
    %cst_56 = arith.constant 0.000000e+00 : f32
    %133 = vector.broadcast %cst_56 : f32 to vector<8x1xf32>
    %134 = arith.cmpf oeq, %132, %133 : vector<8x1xf32>
    %135 = arith.extui %134 : vector<8x1xi1> to vector<8x1xi32>
    %136 = arith.sitofp %135 : vector<8x1xi32> to vector<8x1xf32>
    %137 = arith.addf %132, %136 : vector<8x1xf32>
    %cst_57 = arith.constant 9.99999968E-21 : f32
    %138 = vector.broadcast %cst_57 : f32 to vector<8x1xf32>
    %139 = arith.addf %137, %138 : vector<8x1xf32>
    %140 = tpu.reciprocal %139 : vector<8x1xf32> -> vector<8x1xf32>
    %141 = vector.broadcast %140 : vector<8x1xf32> to vector<8x8xf32>
    %142 = arith.mulf %130, %141 : vector<8x8xf32>
    %cst_58 = arith.constant dense<0.000000e+00> : vector<8x8xf32>
    %143 = tpu.matmul %142, %119, %cst_58 {dimension_numbers = #tpu.dot_dimension_numbers<[1], [0], [0], [1], [0, 0, 1, 1], [], []>} : vector<8x8xf32>, vector<8x8xf32>, vector<8x8xf32> -> vector<8x8xf32>
    %144 = vector.extract_strided_slice %27 {offsets = [0, 24], sizes = [8, 8], strides = [1, 1]} : vector<8x32xf32> to vector<8x8xf32>
    %145 = vector.extract_strided_slice %40 {offsets = [0, 24], sizes = [8, 8], strides = [1, 1]} : vector<8x32xf32> to vector<8x8xf32>
    %146 = vector.extract_strided_slice %53 {offsets = [0, 24], sizes = [8, 8], strides = [1, 1]} : vector<8x32xf32> to vector<8x8xf32>
    %cst_59 = arith.constant dense<0.000000e+00> : vector<8x8xf32>
    %147 = tpu.matmul %144, %145, %cst_59 {dimension_numbers = #tpu.dot_dimension_numbers<[1], [1], [0], [0], [0, 0, 1, 0], [], []>} : vector<8x8xf32>, vector<8x8xf32>, vector<8x8xf32> -> vector<8x8xf32>
    %cst_60 = arith.constant 0.176776692 : f32
    %148 = vector.broadcast %cst_60 : f32 to vector<8x8xf32>
    %149 = arith.mulf %147, %148 : vector<8x8xf32>
    %150 = arith.addf %149, %55 : vector<8x8xf32>
    %151 = arith.mulf %150, %62 : vector<8x8xf32>
    %cst_61 = arith.constant dense<0xFF800000> : vector<8xf32>
    %152 = vector.multi_reduction <maximumf>, %151, %cst_61 [1] : vector<8x8xf32> to vector<8xf32>
    %153 = vector.shape_cast %152 : vector<8xf32> to vector<8x1xf32>
    %154 = vector.broadcast %153 : vector<8x1xf32> to vector<8x8xf32>
    %155 = arith.subf %151, %154 : vector<8x8xf32>
    %156 = math.exp %155 : vector<8x8xf32>
    %157 = arith.mulf %156, %62 : vector<8x8xf32>
    %cst_62 = arith.constant dense<0.000000e+00> : vector<8xf32>
    %158 = vector.multi_reduction <add>, %157, %cst_62 [1] : vector<8x8xf32> to vector<8xf32>
    %159 = vector.shape_cast %158 : vector<8xf32> to vector<8x1xf32>
    %cst_63 = arith.constant 0.000000e+00 : f32
    %160 = vector.broadcast %cst_63 : f32 to vector<8x1xf32>
    %161 = arith.cmpf oeq, %159, %160 : vector<8x1xf32>
    %162 = arith.extui %161 : vector<8x1xi1> to vector<8x1xi32>
    %163 = arith.sitofp %162 : vector<8x1xi32> to vector<8x1xf32>
    %164 = arith.addf %159, %163 : vector<8x1xf32>
    %cst_64 = arith.constant 9.99999968E-21 : f32
    %165 = vector.broadcast %cst_64 : f32 to vector<8x1xf32>
    %166 = arith.addf %164, %165 : vector<8x1xf32>
    %167 = tpu.reciprocal %166 : vector<8x1xf32> -> vector<8x1xf32>
    %168 = vector.broadcast %167 : vector<8x1xf32> to vector<8x8xf32>
    %169 = arith.mulf %157, %168 : vector<8x8xf32>
    %cst_65 = arith.constant dense<0.000000e+00> : vector<8x8xf32>
    %170 = tpu.matmul %169, %146, %cst_65 {dimension_numbers = #tpu.dot_dimension_numbers<[1], [0], [0], [1], [0, 0, 1, 1], [], []>} : vector<8x8xf32>, vector<8x8xf32>, vector<8x8xf32> -> vector<8x8xf32>
    %171 = tpu.concatenate %89, %116, %143, %170 in 1 : vector<8x8xf32>, vector<8x8xf32>, vector<8x8xf32>, vector<8x8xf32> -> vector<8x32xf32>
    %c0_66 = arith.constant 0 : index
    %c0_67 = arith.constant 0 : index
    %172 = vector.load %arg13[%c0_66, %c0_67] : memref<32x32xf32, #tpu.memory_space<vmem>>, vector<32x32xf32>
    %cst_68 = arith.constant dense<0.000000e+00> : vector<8x32xf32>
    %173 = tpu.matmul %171, %172, %cst_68 {dimension_numbers = #tpu.dot_dimension_numbers<[1], [0], [0], [1], [0, 0, 1, 1], [], []>} : vector<8x32xf32>, vector<32x32xf32>, vector<8x32xf32> -> vector<8x32xf32>
    %c0_69 = arith.constant 0 : index
    %c0_70 = arith.constant 0 : index
    %174 = vector.load %arg14[%c0_69, %c0_70] : memref<1x32xf32, #tpu.memory_space<vmem>>, vector<1x32xf32>
    %175 = vector.broadcast %174 : vector<1x32xf32> to vector<8x32xf32>
    %176 = arith.addf %173, %175 : vector<8x32xf32>
    %cst_71 = arith.constant dense<0.000000e+00> : vector<8xf32>
    %177 = vector.multi_reduction <add>, %176, %cst_71 [1] : vector<8x32xf32> to vector<8xf32>
    %178 = vector.shape_cast %177 : vector<8xf32> to vector<8x1xf32>
    %cst_72 = arith.constant 3.200000e+01 : f32
    %179 = vector.broadcast %cst_72 : f32 to vector<8x1xf32>
    %180 = arith.divf %178, %179 : vector<8x1xf32>
    %181 = vector.broadcast %180 : vector<8x1xf32> to vector<8x32xf32>
    %182 = arith.subf %176, %181 : vector<8x32xf32>
    %183 = arith.mulf %182, %182 : vector<8x32xf32>
    %cst_73 = arith.constant dense<0.000000e+00> : vector<8xf32>
    %184 = vector.multi_reduction <add>, %183, %cst_73 [1] : vector<8x32xf32> to vector<8xf32>
    %185 = vector.shape_cast %184 : vector<8xf32> to vector<8x1xf32>
    %cst_74 = arith.constant 3.200000e+01 : f32
    %186 = vector.broadcast %cst_74 : f32 to vector<8x1xf32>
    %187 = arith.divf %185, %186 : vector<8x1xf32>
    %188 = vector.broadcast %180 : vector<8x1xf32> to vector<8x32xf32>
    %189 = arith.subf %176, %188 : vector<8x32xf32>
    %cst_75 = arith.constant 9.99999974E-6 : f32
    %190 = vector.broadcast %cst_75 : f32 to vector<8x1xf32>
    %191 = arith.addf %187, %190 : vector<8x1xf32>
    %192 = math.rsqrt %191 : vector<8x1xf32>
    %193 = vector.broadcast %192 : vector<8x1xf32> to vector<8x32xf32>
    %194 = arith.mulf %189, %193 : vector<8x32xf32>
    %c0_76 = arith.constant 0 : index
    %c0_77 = arith.constant 0 : index
    %195 = vector.load %arg15[%c0_76, %c0_77] : memref<1x32xf32, #tpu.memory_space<vmem>>, vector<1x32xf32>
    %196 = vector.broadcast %195 : vector<1x32xf32> to vector<8x32xf32>
    %197 = arith.mulf %194, %196 : vector<8x32xf32>
    %c0_78 = arith.constant 0 : index
    %c0_79 = arith.constant 0 : index
    %198 = vector.load %arg16[%c0_78, %c0_79] : memref<1x32xf32, #tpu.memory_space<vmem>>, vector<1x32xf32>
    %199 = vector.broadcast %198 : vector<1x32xf32> to vector<8x32xf32>
    %200 = arith.addf %197, %199 : vector<8x32xf32>
    %c0_80 = arith.constant 0 : index
    %c0_81 = arith.constant 0 : index
    %c0_82 = arith.constant 0 : index
    %201 = vector.load %arg17[%c0_80, %c0_81, %c0_82] : memref<1x8x32xf32, #tpu.memory_space<vmem>>, vector<1x8x32xf32>
    %202 = vector.shape_cast %201 : vector<1x8x32xf32> to vector<8x32xf32>
    %203 = vector.shape_cast %200 : vector<8x32xf32> to vector<1x8x32xf32>
    tpu.vector_store %arg17[%c0_80, %c0_81, %c0_82], %203 {strides = array<i32>} : memref<1x8x32xf32, #tpu.memory_space<vmem>>, vector<1x8x32xf32>,
    return
  }
  func.func @transform_0(%arg0: i32) -> (i32, i32, i32) {
    %c0_i32 = arith.constant 0 : i32
    %c0_i32_0 = arith.constant 0 : i32
    %c0_i32_1 = arith.constant 0 : i32
    return %arg0, %c0_i32, %c0_i32_0 : i32, i32, i32
  }
  func.func @transform_1(%arg0: i32) -> (i32, i32) {
    %c0_i32 = arith.constant 0 : i32
    %c0_i32_0 = arith.constant 0 : i32
    %c0_i32_1 = arith.constant 0 : i32
    return %c0_i32, %c0_i32_0 : i32, i32
  }
  func.func @transform_2(%arg0: i32) -> (i32, i32) {
    %c0_i32 = arith.constant 0 : i32
    %c0_i32_0 = arith.constant 0 : i32
    %c0_i32_1 = arith.constant 0 : i32
    return %c0_i32, %c0_i32_0 : i32, i32
  }
  func.func @transform_3(%arg0: i32) -> (i32, i32, i32) {
    %c0_i32 = arith.constant 0 : i32
    %c0_i32_0 = arith.constant 0 : i32
    %c0_i32_1 = arith.constant 0 : i32
    return %arg0, %c0_i32, %c0_i32_0 : i32, i32, i32
  }
  func.func @transform_4(%arg0: i32) -> (i32, i32, i32) {
    %c0_i32 = arith.constant 0 : i32
    %c0_i32_0 = arith.constant 0 : i32
    %c0_i32_1 = arith.constant 0 : i32
    return %arg0, %c0_i32, %c0_i32_0 : i32, i32, i32
  }
  func.func @transform_5(%arg0: i32) -> (i32, i32, i32) {
    %c0_i32 = arith.constant 0 : i32
    %c0_i32_0 = arith.constant 0 : i32
    %c0_i32_1 = arith.constant 0 : i32
    return %arg0, %c0_i32, %c0_i32_0 : i32, i32, i32
  }
  func.func @transform_6(%arg0: i32) -> (i32, i32) {
    %c0_i32 = arith.constant 0 : i32
    %c0_i32_0 = arith.constant 0 : i32
    %c0_i32_1 = arith.constant 0 : i32
    return %c0_i32, %c0_i32_0 : i32, i32
  }
  func.func @transform_7(%arg0: i32) -> (i32, i32) {
    %c0_i32 = arith.constant 0 : i32
    %c0_i32_0 = arith.constant 0 : i32
    %c0_i32_1 = arith.constant 0 : i32
    return %c0_i32, %c0_i32_0 : i32, i32
  }
  func.func @transform_8(%arg0: i32) -> (i32, i32) {
    %c0_i32 = arith.constant 0 : i32
    %c0_i32_0 = arith.constant 0 : i32
    %c0_i32_1 = arith.constant 0 : i32
    return %c0_i32, %c0_i32_0 : i32, i32
  }
  func.func @transform_9(%arg0: i32) -> (i32, i32) {
    %c0_i32 = arith.constant 0 : i32
    %c0_i32_0 = arith.constant 0 : i32
    %c0_i32_1 = arith.constant 0 : i32
    return %c0_i32, %c0_i32_0 : i32, i32
  }
  func.func @transform_10(%arg0: i32) -> (i32, i32) {
    %c0_i32 = arith.constant 0 : i32
    %c0_i32_0 = arith.constant 0 : i32
    %c0_i32_1 = arith.constant 0 : i32
    return %c0_i32, %c0_i32_0 : i32, i32
  }
  func.func @transform_11(%arg0: i32) -> (i32, i32) {
    %c0_i32 = arith.constant 0 : i32
    %c0_i32_0 = arith.constant 0 : i32
    %c0_i32_1 = arith.constant 0 : i32
    return %c0_i32, %c0_i32_0 : i32, i32
  }
  func.func @transform_12(%arg0: i32) -> (i32, i32) {
    %c0_i32 = arith.constant 0 : i32
    %c0_i32_0 = arith.constant 0 : i32
    %c0_i32_1 = arith.constant 0 : i32
    return %c0_i32, %c0_i32_0 : i32, i32
  }
  func.func @transform_13(%arg0: i32) -> (i32, i32) {
    %c0_i32 = arith.constant 0 : i32
    %c0_i32_0 = arith.constant 0 : i32
    %c0_i32_1 = arith.constant 0 : i32
    return %c0_i32, %c0_i32_0 : i32, i32
  }
  func.func @transform_14(%arg0: i32) -> (i32, i32) {
    %c0_i32 = arith.constant 0 : i32
    %c0_i32_0 = arith.constant 0 : i32
    %c0_i32_1 = arith.constant 0 : i32
    return %c0_i32, %c0_i32_0 : i32, i32
  }
  func.func @transform_15(%arg0: i32) -> (i32, i32) {
    %c0_i32 = arith.constant 0 : i32
    %c0_i32_0 = arith.constant 0 : i32
    %c0_i32_1 = arith.constant 0 : i32
    return %c0_i32, %c0_i32_0 : i32, i32
  }
  func.func @transform_16(%arg0: i32) -> (i32, i32, i32) {
    %c0_i32 = arith.constant 0 : i32
    %c0_i32_0 = arith.constant 0 : i32
    %c0_i32_1 = arith.constant 0 : i32
    return %arg0, %c0_i32, %c0_i32_0 : i32, i32, i32
  }
}

</mosaic_0001>

<llo_original>
// kernel: tpu_custom_call.1
$region0: #{tpu_custom_call.1}
  #allocation0 [shape = 'u32[]', space=smem, size = 0x4, offset = 0x4, fixed_abs, tag = 'smem constant byte address 0x4 - core index']
  #allocation1 [shape = 'u32[144,128]{1,0:T(1,128)}', space=vmem, size = 0x12000, scoped, tag = 'internal scratch']
  %s0 = inlined_call_operand.hbm [shape: f32[2,1,8], index: 0, kind: input, shape index: {}]
  %s1 = inlined_call_operand.hbm [shape: f32[8,8], index: 1, kind: input, shape index: {}]
  %s2 = inlined_call_operand.hbm [shape: f32[8,8], index: 2, kind: input, shape index: {}]
  %s3 = inlined_call_operand.hbm [shape: f32[2,8,32], index: 3, kind: input, shape index: {}]
  %s4 = inlined_call_operand.hbm [shape: f32[2,8,32], index: 4, kind: input, shape index: {}]
  %s5 = inlined_call_operand.hbm [shape: f32[2,8,32], index: 5, kind: input, shape index: {}]
  %s6 = inlined_call_operand.hbm [shape: f32[32,32], index: 6, kind: input, shape index: {}]
  %s7 = inlined_call_operand.hbm [shape: f32[32,32], index: 7, kind: input, shape index: {}]
  %s8 = inlined_call_operand.hbm [shape: f32[32,32], index: 8, kind: input, shape index: {}]
  %s9 = inlined_call_operand.vmem [shape: f32[32,32], index: 9, kind: input, shape index: {}]
  %s10 = inlined_call_operand.vmem [shape: f32[1,32], index: 10, kind: input, shape index: {}]
  %s11 = inlined_call_operand.vmem [shape: f32[1,32], index: 11, kind: input, shape index: {}]
  %s12 = inlined_call_operand.hbm [shape: f32[32,32], index: 12, kind: input, shape index: {}]
  %s13 = inlined_call_operand.vmem [shape: f32[1,32], index: 13, kind: input, shape index: {}]
  %s14 = inlined_call_operand.vmem [shape: f32[1,32], index: 14, kind: input, shape index: {}]
  %s15 = inlined_call_operand.vmem [shape: f32[1,32], index: 15, kind: input, shape index: {}]
  %s16 = inlined_call_operand.hbm [shape: f32[2,8,32], index: 16, kind: output, shape index: {}]
  %s17 = sld [smem:[#allocation0]]
  $region137: #{tpu_custom_call.1} parent=0
    _
  %s19 = ssub.s32 1, %s17
  %s20 = scalar_select 0, %s19, %s17
  $region1: #{tpu_custom_call.1} parent=0
    #allocation2 [shape = 'u8[1024]{0}', space=vmem, size = 0x400, scoped, tag = 'input window, operand 0']
    #allocation3 [shape = 's32[2]{0}', space=sflag, size = 0x8, scoped, tag = 'scoped memory for tpu_custom_call.1']
    #allocation4 [shape = 's32[2]{0}', space=sflag, size = 0x8, scoped, tag = 'scoped memory for tpu_custom_call.1']
    #allocation5 [shape = 'u8[4096]{0}', space=vmem, size = 0x1000, scoped, tag = 'input window, operand 1, single buffered']
    #allocation6 [shape = 's32[1]{0}', space=sflag, size = 0x4, scoped, tag = 'scoped memory for tpu_custom_call.1']
    #allocation7 [shape = 'u8[4096]{0}', space=vmem, size = 0x1000, scoped, tag = 'input window, operand 2, single buffered']
    #allocation8 [shape = 'u8[8192]{0}', space=vmem, size = 0x2000, scoped, tag = 'input window, operand 3']
    #allocation9 [shape = 's32[2]{0}', space=sflag, size = 0x8, scoped, tag = 'scoped memory for tpu_custom_call.1']
    #allocation10 [shape = 'u8[8192]{0}', space=vmem, size = 0x2000, scoped, tag = 'input window, operand 4']
    #allocation11 [shape = 'u8[8192]{0}', space=vmem, size = 0x2000, scoped, tag = 'input window, operand 5']
    #allocation12 [shape = 's32[2]{0}', space=sflag, size = 0x8, scoped, tag = 'scoped memory for tpu_custom_call.1']
    #allocation13 [shape = 'u8[16384]{0}', space=vmem, size = 0x4000, scoped, tag = 'input window, operand 6, single buffered']
    #allocation14 [shape = 'u8[16384]{0}', space=vmem, size = 0x4000, scoped, tag = 'input window, operand 7, single buffered']
    #allocation15 [shape = 's32[1]{0}', space=sflag, size = 0x4, scoped, tag = 'scoped memory for tpu_custom_call.1']
    #allocation16 [shape = 'u8[16384]{0}', space=vmem, size = 0x4000, scoped, tag = 'input window, operand 8, single buffered']
    #allocation17 [shape = 'u8[16384]{0}', space=vmem, size = 0x4000, scoped, tag = 'input window, operand 12, single buffered']
    #allocation18 [shape = 's32[1]{0}', space=sflag, size = 0x4, scoped, tag = 'scoped memory for tpu_custom_call.1']
    #allocation19 [shape = 'u8[8192]{0}', space=vmem, size = 0x2000, scoped, tag = 'output window, operand 0']
    %21 = vsyncpa [#allocation3], 0
    %s22 = scalar_lea.sflag [#allocation3], 1
    %23 = vsyncpa %s22, 0
    %24 = vsyncpa [#allocation6], 0
    %25 = vsyncpa [#allocation9], 0
    %s26 = scalar_lea.sflag [#allocation9], 1
    %27 = vsyncpa %s26, 0
    %28 = vsyncpa [#allocation12], 0
    %s29 = scalar_lea.sflag [#allocation12], 1
    %30 = vsyncpa %s29, 0
    %31 = vsyncpa [#allocation15], 0
    %32 = vsyncpa [#allocation18], 0
    %33 = vsyncpa [#allocation4], 0
    %s34 = scalar_lea.sflag [#allocation4], 1
    %35 = vsyncpa %s34, 0
    loop: start=0, step=1, limit=4
    $region2: #{tpu_custom_call.1} parent=1 // loop_pre_header
      _
    $region3: #{tpu_custom_call.1} parent=1 // loop_header
      %s37 = sphi 0, %s41
      %p38 = scmp.ge.s32.totalorder %s37, 4
      %s47 = sphi 0, %s49
      %s50 = sphi 0, %s47
      %s51 = sphi 0, %s50
      %s67 = sphi 0, %s51
      %s71 = sphi 0, %s71
      %s73 = sphi 0, %s71
      %s74 = sphi 0, %s73
      %s88 = sphi 0, %s74
      %s92 = sphi 0, %s92
      %s94 = sphi 0, %s92
      %s95 = sphi 0, %s94
      %s109 = sphi 0, %s95
      %s115 = sphi 0, %s117
      %s118 = sphi 0, %s115
      %s119 = sphi 0, %s118
      %s135 = sphi 0, %s119
      %s141 = sphi 0, %s143
      %s144 = sphi 0, %s141
      %s145 = sphi 0, %s144
      %s161 = sphi 0, %s145
      %s167 = sphi 0, %s169
      %s170 = sphi 0, %s167
      %s171 = sphi 0, %s170
      %s187 = sphi 0, %s171
      %s191 = sphi 0, %s191
      %s193 = sphi 0, %s191
      %s194 = sphi 0, %s193
      %s208 = sphi 0, %s194
      %s212 = sphi 0, %s212
      %s214 = sphi 0, %s212
      %s215 = sphi 0, %s214
      %s229 = sphi 0, %s215
      %s233 = sphi 0, %s233
      %s235 = sphi 0, %s233
      %s236 = sphi 0, %s235
      %s250 = sphi 0, %s236
      %s254 = sphi 0, %s254
      %s256 = sphi 0, %s254
      %s257 = sphi 0, %s256
      %s271 = sphi 0, %s257
      %s275 = sphi 0, %s275
      %s277 = sphi 0, %s275
      %s278 = sphi 0, %s277
      %s292 = sphi 0, %s278
      %s296 = sphi 0, %s296
      %s298 = sphi 0, %s296
      %s299 = sphi 0, %s298
      %s313 = sphi 0, %s299
      %s317 = sphi 0, %s317
      %s319 = sphi 0, %s317
      %s320 = sphi 0, %s319
      %s334 = sphi 0, %s320
      %s338 = sphi 0, %s338
      %s340 = sphi 0, %s338
      %s341 = sphi 0, %s340
      %s355 = sphi 0, %s341
      %s359 = sphi 0, %s359
      %s361 = sphi 0, %s359
      %s362 = sphi 0, %s361
      %s376 = sphi 0, %s362
      %s380 = sphi 0, %s380
      %s382 = sphi 0, %s380
      %s383 = sphi 0, %s382
      %s397 = sphi 0, %s383
      %s403 = sphi 0, %s405
      %s406 = sphi 0, %s403
      %s407 = sphi 0, %s406
      %s423 = sphi 0, %s407
    $region4: #{tpu_custom_call.1} parent=1 // loop_header_branch
      %40 = sbr.rel (%p38) target = $region8
    $region5: #{tpu_custom_call.1} parent=1 // loop_body
      %s42 = ssub.s32 %s37, 1
      %s43 = ssub.s32 %s37, 2
      %s44 = sadd.s32 %s37, 1
      %s45 = ssub.s32 %s37, %s44
      %p46 = scmp.eq.s32.totalorder %s45, 0
      %s48 = sadd.s32 %s47, 1
      %s49 = scalar_select %p46, %s47, %s48
      %p52 = pneg %p46
      %p53 = scmp.eq.s32.totalorder %s37, 1
      %p54 = por %p52, %p53
      %p55 = scmp.ne.s32.totalorder %s47, %s50
      %p56 = scmp.eq.s32.totalorder %s37, 0
      %p57 = por %p55, %p56
      %p58 = scmp.ne.s32.totalorder %s47, %s50
      %p59 = scmp.eq.s32.totalorder %s42, 1
      %p60 = por %p58, %p59
      %p61 = scmp.ne.s32.totalorder %s50, %s51
      %p62 = scmp.eq.s32.totalorder %s42, 0
      %p63 = por %p61, %p62
      %p64 = scmp.ne.s32.totalorder %s50, %s51
      %p65 = scmp.eq.s32.totalorder %s43, 1
      %p66 = por %p64, %p65
      %p68 = scmp.ne.s32.totalorder %s51, %s67
      %p69 = scmp.eq.s32.totalorder %s43, 0
      %p70 = por %p68, %p69
      %s72 = sadd.s32 %s71, 1
      %p75 = scmp.eq.s32.totalorder %s37, 1
      %p76 = scmp.ne.s32.totalorder %s71, %s73
      %p77 = scmp.eq.s32.totalorder %s37, 0
      %p78 = por %p76, %p77
      %p79 = scmp.ne.s32.totalorder %s71, %s73
      %p80 = scmp.eq.s32.totalorder %s42, 1
      %p81 = por %p79, %p80
      %p82 = scmp.ne.s32.totalorder %s73, %s74
      %p83 = scmp.eq.s32.totalorder %s42, 0
      %p84 = por %p82, %p83
      %p85 = scmp.ne.s32.totalorder %s73, %s74
      %p86 = scmp.eq.s32.totalorder %s43, 1
      %p87 = por %p85, %p86
      %p89 = scmp.ne.s32.totalorder %s74, %s88
      %p90 = scmp.eq.s32.totalorder %s43, 0
      %p91 = por %p89, %p90
      %s93 = sadd.s32 %s92, 1
      %p96 = scmp.eq.s32.totalorder %s37, 1
      %p97 = scmp.ne.s32.totalorder %s92, %s94
      %p98 = scmp.eq.s32.totalorder %s37, 0
      %p99 = por %p97, %p98
      %p100 = scmp.ne.s32.totalorder %s92, %s94
      %p101 = scmp.eq.s32.totalorder %s42, 1
      %p102 = por %p100, %p101
      %p103 = scmp.ne.s32.totalorder %s94, %s95
      %p104 = scmp.eq.s32.totalorder %s42, 0
      %p105 = por %p103, %p104
      %p106 = scmp.ne.s32.totalorder %s94, %s95
      %p107 = scmp.eq.s32.totalorder %s43, 1
      %p108 = por %p106, %p107
      %p110 = scmp.ne.s32.totalorder %s95, %s109
      %p111 = scmp.eq.s32.totalorder %s43, 0
      %p112 = por %p110, %p111
      %s113 = ssub.s32 %s37, %s44
      %p114 = scmp.eq.s32.totalorder %s113, 0
      %s116 = sadd.s32 %s115, 1
      %s117 = scalar_select %p114, %s115, %s116
      %p120 = pneg %p114
      %p121 = scmp.eq.s32.totalorder %s37, 1
      %p122 = por %p120, %p121
      %p123 = scmp.ne.s32.totalorder %s115, %s118
      %p124 = scmp.eq.s32.totalorder %s37, 0
      %p125 = por %p123, %p124
      %p126 = scmp.ne.s32.totalorder %s115, %s118
      %p127 = scmp.eq.s32.totalorder %s42, 1
      %p128 = por %p126, %p127
      %p129 = scmp.ne.s32.totalorder %s118, %s119
      %p130 = scmp.eq.s32.totalorder %s42, 0
      %p131 = por %p129, %p130
      %p132 = scmp.ne.s32.totalorder %s118, %s119
      %p133 = scmp.eq.s32.totalorder %s43, 1
      %p134 = por %p132, %p133
      %p136 = scmp.ne.s32.totalorder %s119, %s135
      %p137 = scmp.eq.s32.totalorder %s43, 0
      %p138 = por %p136, %p137
      %s139 = ssub.s32 %s37, %s44
      %p140 = scmp.eq.s32.totalorder %s139, 0
      %s142 = sadd.s32 %s141, 1
      %s143 = scalar_select %p140, %s141, %s142
      %p146 = pneg %p140
      %p147 = scmp.eq.s32.totalorder %s37, 1
      %p148 = por %p146, %p147
      %p149 = scmp.ne.s32.totalorder %s141, %s144
      %p150 = scmp.eq.s32.totalorder %s37, 0
      %p151 = por %p149, %p150
      %p152 = scmp.ne.s32.totalorder %s141, %s144
      %p153 = scmp.eq.s32.totalorder %s42, 1
      %p154 = por %p152, %p153
      %p155 = scmp.ne.s32.totalorder %s144, %s145
      %p156 = scmp.eq.s32.totalorder %s42, 0
      %p157 = por %p155, %p156
      %p158 = scmp.ne.s32.totalorder %s144, %s145
      %p159 = scmp.eq.s32.totalorder %s43, 1
      %p160 = por %p158, %p159
      %p162 = scmp.ne.s32.totalorder %s145, %s161
      %p163 = scmp.eq.s32.totalorder %s43, 0
      %p164 = por %p162, %p163
      %s165 = ssub.s32 %s37, %s44
      %p166 = scmp.eq.s32.totalorder %s165, 0
      %s168 = sadd.s32 %s167, 1
      %s169 = scalar_select %p166, %s167, %s168
      %p172 = pneg %p166
      %p173 = scmp.eq.s32.totalorder %s37, 1
      %p174 = por %p172, %p173
      %p175 = scmp.ne.s32.totalorder %s167, %s170
      %p176 = scmp.eq.s32.totalorder %s37, 0
      %p177 = por %p175, %p176
      %p178 = scmp.ne.s32.totalorder %s167, %s170
      %p179 = scmp.eq.s32.totalorder %s42, 1
      %p180 = por %p178, %p179
      %p181 = scmp.ne.s32.totalorder %s170, %s171
      %p182 = scmp.eq.s32.totalorder %s42, 0
      %p183 = por %p181, %p182
      %p184 = scmp.ne.s32.totalorder %s170, %s171
      %p185 = scmp.eq.s32.totalorder %s43, 1
      %p186 = por %p184, %p185
      %p188 = scmp.ne.s32.totalorder %s171, %s187
      %p189 = scmp.eq.s32.totalorder %s43, 0
      %p190 = por %p188, %p189
      %s192 = sadd.s32 %s191, 1
      %p195 = scmp.eq.s32.totalorder %s37, 1
      %p196 = scmp.ne.s32.totalorder %s191, %s193
      %p197 = scmp.eq.s32.totalorder %s37, 0
      %p198 = por %p196, %p197
      %p199 = scmp.ne.s32.totalorder %s191, %s193
      %p200 = scmp.eq.s32.totalorder %s42, 1
      %p201 = por %p199, %p200
      %p202 = scmp.ne.s32.totalorder %s193, %s194
      %p203 = scmp.eq.s32.totalorder %s42, 0
      %p204 = por %p202, %p203
      %p205 = scmp.ne.s32.totalorder %s193, %s194
      %p206 = scmp.eq.s32.totalorder %s43, 1
      %p207 = por %p205, %p206
      %p209 = scmp.ne.s32.totalorder %s194, %s208
      %p210 = scmp.eq.s32.totalorder %s43, 0
      %p211 = por %p209, %p210
      %s213 = sadd.s32 %s212, 1
      %p216 = scmp.eq.s32.totalorder %s37, 1
      %p217 = scmp.ne.s32.totalorder %s212, %s214
      %p218 = scmp.eq.s32.totalorder %s37, 0
      %p219 = por %p217, %p218
      %p220 = scmp.ne.s32.totalorder %s212, %s214
      %p221 = scmp.eq.s32.totalorder %s42, 1
      %p222 = por %p220, %p221
      %p223 = scmp.ne.s32.totalorder %s214, %s215
      %p224 = scmp.eq.s32.totalorder %s42, 0
      %p225 = por %p223, %p224
      %p226 = scmp.ne.s32.totalorder %s214, %s215
      %p227 = scmp.eq.s32.totalorder %s43, 1
      %p228 = por %p226, %p227
      %p230 = scmp.ne.s32.totalorder %s215, %s229
      %p231 = scmp.eq.s32.totalorder %s43, 0
      %p232 = por %p230, %p231
      %s234 = sadd.s32 %s233, 1
      %p237 = scmp.eq.s32.totalorder %s37, 1
      %p238 = scmp.ne.s32.totalorder %s233, %s235
      %p239 = scmp.eq.s32.totalorder %s37, 0
      %p240 = por %p238, %p239
      %p241 = scmp.ne.s32.totalorder %s233, %s235
      %p242 = scmp.eq.s32.totalorder %s42, 1
      %p243 = por %p241, %p242
      %p244 = scmp.ne.s32.totalorder %s235, %s236
      %p245 = scmp.eq.s32.totalorder %s42, 0
      %p246 = por %p244, %p245
      %p247 = scmp.ne.s32.totalorder %s235, %s236
      %p248 = scmp.eq.s32.totalorder %s43, 1
      %p249 = por %p247, %p248
      %p251 = scmp.ne.s32.totalorder %s236, %s250
      %p252 = scmp.eq.s32.totalorder %s43, 0
      %p253 = por %p251, %p252
      %s255 = sadd.s32 %s254, 1
      %p258 = scmp.eq.s32.totalorder %s37, 1
      %p259 = scmp.ne.s32.totalorder %s254, %s256
      %p260 = scmp.eq.s32.totalorder %s37, 0
      %p261 = por %p259, %p260
      %p262 = scmp.ne.s32.totalorder %s254, %s256
      %p263 = scmp.eq.s32.totalorder %s42, 1
      %p264 = por %p262, %p263
      %p265 = scmp.ne.s32.totalorder %s256, %s257
      %p266 = scmp.eq.s32.totalorder %s42, 0
      %p267 = por %p265, %p266
      %p268 = scmp.ne.s32.totalorder %s256, %s257
      %p269 = scmp.eq.s32.totalorder %s43, 1
      %p270 = por %p268, %p269
      %p272 = scmp.ne.s32.totalorder %s257, %s271
      %p273 = scmp.eq.s32.totalorder %s43, 0
      %p274 = por %p272, %p273
      %s276 = sadd.s32 %s275, 1
      %p279 = scmp.eq.s32.totalorder %s37, 1
      %p280 = scmp.ne.s32.totalorder %s275, %s277
      %p281 = scmp.eq.s32.totalorder %s37, 0
      %p282 = por %p280, %p281
      %p283 = scmp.ne.s32.totalorder %s275, %s277
      %p284 = scmp.eq.s32.totalorder %s42, 1
      %p285 = por %p283, %p284
      %p286 = scmp.ne.s32.totalorder %s277, %s278
      %p287 = scmp.eq.s32.totalorder %s42, 0
      %p288 = por %p286, %p287
      %p289 = scmp.ne.s32.totalorder %s277, %s278
      %p290 = scmp.eq.s32.totalorder %s43, 1
      %p291 = por %p289, %p290
      %p293 = scmp.ne.s32.totalorder %s278, %s292
      %p294 = scmp.eq.s32.totalorder %s43, 0
      %p295 = por %p293, %p294
      %s297 = sadd.s32 %s296, 1
      %p300 = scmp.eq.s32.totalorder %s37, 1
      %p301 = scmp.ne.s32.totalorder %s296, %s298
      %p302 = scmp.eq.s32.totalorder %s37, 0
      %p303 = por %p301, %p302
      %p304 = scmp.ne.s32.totalorder %s296, %s298
      %p305 = scmp.eq.s32.totalorder %s42, 1
      %p306 = por %p304, %p305
      %p307 = scmp.ne.s32.totalorder %s298, %s299
      %p308 = scmp.eq.s32.totalorder %s42, 0
      %p309 = por %p307, %p308
      %p310 = scmp.ne.s32.totalorder %s298, %s299
      %p311 = scmp.eq.s32.totalorder %s43, 1
      %p312 = por %p310, %p311
      %p314 = scmp.ne.s32.totalorder %s299, %s313
      %p315 = scmp.eq.s32.totalorder %s43, 0
      %p316 = por %p314, %p315
      %s318 = sadd.s32 %s317, 1
      %p321 = scmp.eq.s32.totalorder %s37, 1
      %p322 = scmp.ne.s32.totalorder %s317, %s319
      %p323 = scmp.eq.s32.totalorder %s37, 0
      %p324 = por %p322, %p323
      %p325 = scmp.ne.s32.totalorder %s317, %s319
      %p326 = scmp.eq.s32.totalorder %s42, 1
      %p327 = por %p325, %p326
      %p328 = scmp.ne.s32.totalorder %s319, %s320
      %p329 = scmp.eq.s32.totalorder %s42, 0
      %p330 = por %p328, %p329
      %p331 = scmp.ne.s32.totalorder %s319, %s320
      %p332 = scmp.eq.s32.totalorder %s43, 1
      %p333 = por %p331, %p332
      %p335 = scmp.ne.s32.totalorder %s320, %s334
      %p336 = scmp.eq.s32.totalorder %s43, 0
      %p337 = por %p335, %p336
      %s339 = sadd.s32 %s338, 1
      %p342 = scmp.eq.s32.totalorder %s37, 1
      %p343 = scmp.ne.s32.totalorder %s338, %s340
      %p344 = scmp.eq.s32.totalorder %s37, 0
      %p345 = por %p343, %p344
      %p346 = scmp.ne.s32.totalorder %s338, %s340
      %p347 = scmp.eq.s32.totalorder %s42, 1
      %p348 = por %p346, %p347
      %p349 = scmp.ne.s32.totalorder %s340, %s341
      %p350 = scmp.eq.s32.totalorder %s42, 0
      %p351 = por %p349, %p350
      %p352 = scmp.ne.s32.totalorder %s340, %s341
      %p353 = scmp.eq.s32.totalorder %s43, 1
      %p354 = por %p352, %p353
      %p356 = scmp.ne.s32.totalorder %s341, %s355
      %p357 = scmp.eq.s32.totalorder %s43, 0
      %p358 = por %p356, %p357
      %s360 = sadd.s32 %s359, 1
      %p363 = scmp.eq.s32.totalorder %s37, 1
      %p364 = scmp.ne.s32.totalorder %s359, %s361
      %p365 = scmp.eq.s32.totalorder %s37, 0
      %p366 = por %p364, %p365
      %p367 = scmp.ne.s32.totalorder %s359, %s361
      %p368 = scmp.eq.s32.totalorder %s42, 1
      %p369 = por %p367, %p368
      %p370 = scmp.ne.s32.totalorder %s361, %s362
      %p371 = scmp.eq.s32.totalorder %s42, 0
      %p372 = por %p370, %p371
      %p373 = scmp.ne.s32.totalorder %s361, %s362
      %p374 = scmp.eq.s32.totalorder %s43, 1
      %p375 = por %p373, %p374
      %p377 = scmp.ne.s32.totalorder %s362, %s376
      %p378 = scmp.eq.s32.totalorder %s43, 0
      %p379 = por %p377, %p378
      %s381 = sadd.s32 %s380, 1
      %p384 = scmp.eq.s32.totalorder %s37, 1
      %p385 = scmp.ne.s32.totalorder %s380, %s382
      %p386 = scmp.eq.s32.totalorder %s37, 0
      %p387 = por %p385, %p386
      %p388 = scmp.ne.s32.totalorder %s380, %s382
      %p389 = scmp.eq.s32.totalorder %s42, 1
      %p390 = por %p388, %p389
      %p391 = scmp.ne.s32.totalorder %s382, %s383
      %p392 = scmp.eq.s32.totalorder %s42, 0
      %p393 = por %p391, %p392
      %p394 = scmp.ne.s32.totalorder %s382, %s383
      %p395 = scmp.eq.s32.totalorder %s43, 1
      %p396 = por %p394, %p395
      %p398 = scmp.ne.s32.totalorder %s383, %s397
      %p399 = scmp.eq.s32.totalorder %s43, 0
      %p400 = por %p398, %p399
      %s401 = ssub.s32 %s37, %s44
      %p402 = scmp.eq.s32.totalorder %s401, 0
      %s404 = sadd.s32 %s403, 1
      %s405 = scalar_select %p402, %s403, %s404
      %p408 = pneg %p402
      %p409 = scmp.eq.s32.totalorder %s37, 1
      %p410 = por %p408, %p409
      %p411 = scmp.ne.s32.totalorder %s403, %s406
      %p412 = scmp.eq.s32.totalorder %s37, 0
      %p413 = por %p411, %p412
      %p414 = scmp.ne.s32.totalorder %s403, %s406
      %p415 = scmp.eq.s32.totalorder %s42, 1
      %p416 = por %p414, %p415
      %p417 = scmp.ne.s32.totalorder %s406, %s407
      %p418 = scmp.eq.s32.totalorder %s42, 0
      %p419 = por %p417, %p418
      %p420 = scmp.ne.s32.totalorder %s406, %s407
      %p421 = scmp.eq.s32.totalorder %s43, 1
      %p422 = por %p420, %p421
      %p424 = scmp.ne.s32.totalorder %s407, %s423
      %p425 = scmp.eq.s32.totalorder %s43, 0
      %p426 = por %p424, %p425
      %p427 = scmp.le.s32.totalorder 1, %s37
      %p428 = scmp.lt.s32.totalorder %s37, 3
      %p429 = pnand %p427, %p428
      %p430 = pneg %p429
      // Predicated region
      $region9: #{tpu_custom_call.1} parent=5 // pred_check
        _
      $region10: #{tpu_custom_call.1} parent=5 // pred_check_branch
        %432 = sbr.rel (%p429) target = $region12
      $region11: #{tpu_custom_call.1} parent=5 // pred_region
        %s433 = ssub.s32 %s37, 1
        // Predicated region
        $region13: #{tpu_custom_call.1} parent=11 // pred_check
          %p434 = pneg %p84
        $region14: #{tpu_custom_call.1} parent=11 // pred_check_branch
          %436 = sbr.rel (%p434) target = $region16
        $region15: #{tpu_custom_call.1} parent=11 // pred_region
          %s438 = ssub.s32 128, 128
          %439 = vsyncadd [#allocation6], %s438
          %s441 = sshll.u32 [#allocation5], 4
          %s442 = int_to_ptr.vmem [resolvable:$true] %s441
          %444 = dma.hbm_to_vmem [thread:$0]  %s1, 128, %s442, [#allocation6]
        $region16: #{tpu_custom_call.1} parent=11 // pred_fallthru
          _
        // Predicated region
        $region17: #{tpu_custom_call.1} parent=11 // pred_check
          %p445 = pneg %p105
        $region18: #{tpu_custom_call.1} parent=11 // pred_check_branch
          %447 = sbr.rel (%p445) target = $region20
        $region19: #{tpu_custom_call.1} parent=11 // pred_region
          %s449 = ssub.s32 128, 128
          %450 = vsyncadd [#allocation6], %s449
          %s452 = sshll.u32 [#allocation7], 4
          %s453 = int_to_ptr.vmem [resolvable:$true] %s452
          %455 = dma.hbm_to_vmem [thread:$0]  %s2, 128, %s453, [#allocation6]
        $region20: #{tpu_custom_call.1} parent=11 // pred_fallthru
          _
        // Predicated region
        $region21: #{tpu_custom_call.1} parent=11 // pred_check
          %p456 = pneg %p204
        $region22: #{tpu_custom_call.1} parent=11 // pred_check_branch
          %458 = sbr.rel (%p456) target = $region24
        $region23: #{tpu_custom_call.1} parent=11 // pred_region
          %s460 = ssub.s32 512, 512
          %461 = vsyncadd [#allocation12], %s460
          %s462 = sshll.u32 [#allocation13], 4
          %s463 = int_to_ptr.vmem [resolvable:$true] %s462
          %468 = dma.hbm_to_vmem [thread:$0]  %s6, 512, %s463, [#allocation12], 128, 128, 8
        $region24: #{tpu_custom_call.1} parent=11 // pred_fallthru
          _
        // Predicated region
        $region25: #{tpu_custom_call.1} parent=11 // pred_check
          %p469 = pneg %p225
        $region26: #{tpu_custom_call.1} parent=11 // pred_check_branch
          %471 = sbr.rel (%p469) target = $region28
        $region27: #{tpu_custom_call.1} parent=11 // pred_region
          %s473 = ssub.s32 512, 512
          %474 = vsyncadd [#allocation15], %s473
          %s475 = sshll.u32 [#allocation14], 4
          %s476 = int_to_ptr.vmem [resolvable:$true] %s475
          %481 = dma.hbm_to_vmem [thread:$0]  %s7, 512, %s476, [#allocation15], 128, 128, 8
        $region28: #{tpu_custom_call.1} parent=11 // pred_fallthru
          _
        // Predicated region
        $region29: #{tpu_custom_call.1} parent=11 // pred_check
          %p482 = pneg %p246
        $region30: #{tpu_custom_call.1} parent=11 // pred_check_branch
          %484 = sbr.rel (%p482) target = $region32
        $region31: #{tpu_custom_call.1} parent=11 // pred_region
          %s486 = ssub.s32 512, 512
          %487 = vsyncadd [#allocation15], %s486
          %s488 = sshll.u32 [#allocation16], 4
          %s489 = int_to_ptr.vmem [resolvable:$true] %s488
          %494 = dma.hbm_to_vmem [thread:$0]  %s8, 512, %s489, [#allocation15], 128, 128, 8
        $region32: #{tpu_custom_call.1} parent=11 // pred_fallthru
          _
        // Predicated region
        $region33: #{tpu_custom_call.1} parent=11 // pred_check
          %p495 = pneg %p267
        $region34: #{tpu_custom_call.1} parent=11 // pred_check_branch
          %497 = sbr.rel (%p495) target = $region36
        $region35: #{tpu_custom_call.1} parent=11 // pred_region
          _
        $region36: #{tpu_custom_call.1} parent=11 // pred_fallthru
          _
        // Predicated region
        $region37: #{tpu_custom_call.1} parent=11 // pred_check
          %p498 = pneg %p288
        $region38: #{tpu_custom_call.1} parent=11 // pred_check_branch
          %500 = sbr.rel (%p498) target = $region40
        $region39: #{tpu_custom_call.1} parent=11 // pred_region
          _
        $region40: #{tpu_custom_call.1} parent=11 // pred_fallthru
          _
        // Predicated region
        $region41: #{tpu_custom_call.1} parent=11 // pred_check
          %p501 = pneg %p309
        $region42: #{tpu_custom_call.1} parent=11 // pred_check_branch
          %503 = sbr.rel (%p501) target = $region44
        $region43: #{tpu_custom_call.1} parent=11 // pred_region
          _
        $region44: #{tpu_custom_call.1} parent=11 // pred_fallthru
          _
        // Predicated region
        $region45: #{tpu_custom_call.1} parent=11 // pred_check
          %p504 = pneg %p330
        $region46: #{tpu_custom_call.1} parent=11 // pred_check_branch
          %506 = sbr.rel (%p504) target = $region48
        $region47: #{tpu_custom_call.1} parent=11 // pred_region
          %s508 = ssub.s32 512, 512
          %509 = vsyncadd [#allocation18], %s508
          %s510 = sshll.u32 [#allocation17], 4
          %s511 = int_to_ptr.vmem [resolvable:$true] %s510
          %516 = dma.hbm_to_vmem [thread:$0]  %s12, 512, %s511, [#allocation18], 128, 128, 8
        $region48: #{tpu_custom_call.1} parent=11 // pred_fallthru
          _
        // Predicated region
        $region49: #{tpu_custom_call.1} parent=11 // pred_check
          %p517 = pneg %p351
        $region50: #{tpu_custom_call.1} parent=11 // pred_check_branch
          %519 = sbr.rel (%p517) target = $region52
        $region51: #{tpu_custom_call.1} parent=11 // pred_region
          _
        $region52: #{tpu_custom_call.1} parent=11 // pred_fallthru
          _
        // Predicated region
        $region53: #{tpu_custom_call.1} parent=11 // pred_check
          %p520 = pneg %p372
        $region54: #{tpu_custom_call.1} parent=11 // pred_check_branch
          %522 = sbr.rel (%p520) target = $region56
        $region55: #{tpu_custom_call.1} parent=11 // pred_region
          _
        $region56: #{tpu_custom_call.1} parent=11 // pred_fallthru
          _
        // Predicated region
        $region57: #{tpu_custom_call.1} parent=11 // pred_check
          %p523 = pneg %p393
        $region58: #{tpu_custom_call.1} parent=11 // pred_check_branch
          %525 = sbr.rel (%p523) target = $region60
        $region59: #{tpu_custom_call.1} parent=11 // pred_region
          _
        $region60: #{tpu_custom_call.1} parent=11 // pred_fallthru
          _
      $region12: #{tpu_custom_call.1} parent=5 // pred_fallthru
        _
      %p526 = scmp.lt.s32.totalorder %s37, 2
      // Predicated region
      $region61: #{tpu_custom_call.1} parent=5 // pred_check
        %p527 = pneg %p526
      $region62: #{tpu_custom_call.1} parent=5 // pred_check_branch
        %529 = sbr.rel (%p527) target = $region64
      $region63: #{tpu_custom_call.1} parent=5 // pred_region
        // Predicated region
        $region65: #{tpu_custom_call.1} parent=63 // pred_check
          %p530 = pneg %p57
        $region66: #{tpu_custom_call.1} parent=63 // pred_check_branch
          %532 = sbr.rel (%p530) target = $region68
        $region67: #{tpu_custom_call.1} parent=63 // pred_region
          %s533 = sand.u32 %s47, 1
          %s534 = scalar_lea.sflag [#allocation3], %s533
          %s535 = sand.u32 %s47, 1
          %s536 = scalar_lea.vmem [#allocation2], %s535
          %s538 = ssub.s32 16, 16
          %539 = vsyncadd %s534, %s538
          %s540 = smul.addr %s37, 16
          %s541 = scalar_lea.hbm %s0, %s540
          %s543 = sshll.u32 %s536, 4
          %s544 = int_to_ptr.vmem [resolvable:$true] %s543
          %546 = dma.hbm_to_vmem [thread:$0]  %s541, 16, %s544, %s534
        $region68: #{tpu_custom_call.1} parent=63 // pred_fallthru
          _
        // Predicated region
        $region69: #{tpu_custom_call.1} parent=63 // pred_check
          %p547 = pneg %p125
        $region70: #{tpu_custom_call.1} parent=63 // pred_check_branch
          %549 = sbr.rel (%p547) target = $region72
        $region71: #{tpu_custom_call.1} parent=63 // pred_region
          %s550 = sand.u32 %s37, 1
          %s551 = scalar_lea.sflag [#allocation9], %s550
          %s552 = sand.u32 %s115, 1
          %s553 = smul.addr %s552, 8
          %s554 = scalar_lea.vmem [#allocation8], %s553
          %s556 = ssub.s32 128, 128
          %557 = vsyncadd %s551, %s556
          %s558 = smul.addr %s37, 128
          %s559 = scalar_lea.hbm %s3, %s558
          %s561 = sshll.u32 %s554, 4
          %s562 = int_to_ptr.vmem [resolvable:$true] %s561
          %564 = dma.hbm_to_vmem [thread:$0]  %s559, 128, %s562, %s551
        $region72: #{tpu_custom_call.1} parent=63 // pred_fallthru
          _
        // Predicated region
        $region73: #{tpu_custom_call.1} parent=63 // pred_check
          %p565 = pneg %p151
        $region74: #{tpu_custom_call.1} parent=63 // pred_check_branch
          %567 = sbr.rel (%p565) target = $region76
        $region75: #{tpu_custom_call.1} parent=63 // pred_region
          %s568 = sand.u32 %s37, 1
          %s569 = scalar_lea.sflag [#allocation9], %s568
          %s570 = sand.u32 %s141, 1
          %s571 = smul.addr %s570, 8
          %s572 = scalar_lea.vmem [#allocation10], %s571
          %s574 = ssub.s32 128, 128
          %575 = vsyncadd %s569, %s574
          %s576 = smul.addr %s37, 128
          %s577 = scalar_lea.hbm %s4, %s576
          %s579 = sshll.u32 %s572, 4
          %s580 = int_to_ptr.vmem [resolvable:$true] %s579
          %582 = dma.hbm_to_vmem [thread:$0]  %s577, 128, %s580, %s569
        $region76: #{tpu_custom_call.1} parent=63 // pred_fallthru
          _
        // Predicated region
        $region77: #{tpu_custom_call.1} parent=63 // pred_check
          %p583 = pneg %p177
        $region78: #{tpu_custom_call.1} parent=63 // pred_check_branch
          %585 = sbr.rel (%p583) target = $region80
        $region79: #{tpu_custom_call.1} parent=63 // pred_region
          %s586 = sand.u32 %s37, 1
          %s587 = scalar_lea.sflag [#allocation12], %s586
          %s588 = sand.u32 %s167, 1
          %s589 = smul.addr %s588, 8
          %s590 = scalar_lea.vmem [#allocation11], %s589
          %s592 = ssub.s32 128, 128
          %593 = vsyncadd %s587, %s592
          %s594 = smul.addr %s37, 128
          %s595 = scalar_lea.hbm %s5, %s594
          %s597 = sshll.u32 %s590, 4
          %s598 = int_to_ptr.vmem [resolvable:$true] %s597
          %600 = dma.hbm_to_vmem [thread:$0]  %s595, 128, %s598, %s587
        $region80: #{tpu_custom_call.1} parent=63 // pred_fallthru
          _
      $region64: #{tpu_custom_call.1} parent=5 // pred_fallthru
        _
      %p601 = scmp.le.s32.totalorder 1, %s37
      %p602 = scmp.lt.s32.totalorder %s37, 3
      %p603 = pnand %p601, %p602
      %p604 = pneg %p603
      // Predicated region
      $region81: #{tpu_custom_call.1} parent=5 // pred_check
        _
      $region82: #{tpu_custom_call.1} parent=5 // pred_check_branch
        %606 = sbr.rel (%p603) target = $region84
      $region83: #{tpu_custom_call.1} parent=5 // pred_region
        %s607 = ssub.s32 %s37, 1
        %s608 = sand.u32 %s50, 1
        %s609 = scalar_lea.sflag [#allocation3], %s608
        %s610 = sand.u32 %s50, 1
        %s611 = scalar_lea.vmem [#allocation2], %s610
        // Predicated region
        $region85: #{tpu_custom_call.1} parent=83 // pred_check
          %p612 = pneg %p63
        $region86: #{tpu_custom_call.1} parent=83 // pred_check_branch
          %614 = sbr.rel (%p612) target = $region88
        $region87: #{tpu_custom_call.1} parent=83 // pred_region
          %615 = dma.done %s609, 16
        $region88: #{tpu_custom_call.1} parent=83 // pred_fallthru
          _
        // Predicated region
        $region89: #{tpu_custom_call.1} parent=83 // pred_check
          %p616 = pneg %p84
        $region90: #{tpu_custom_call.1} parent=83 // pred_check_branch
          %618 = sbr.rel (%p616) target = $region92
        $region91: #{tpu_custom_call.1} parent=83 // pred_region
          %619 = dma.done [#allocation6], 128
        $region92: #{tpu_custom_call.1} parent=83 // pred_fallthru
          _
        // Predicated region
        $region93: #{tpu_custom_call.1} parent=83 // pred_check
          %p620 = pneg %p105
        $region94: #{tpu_custom_call.1} parent=83 // pred_check_branch
          %622 = sbr.rel (%p620) target = $region96
        $region95: #{tpu_custom_call.1} parent=83 // pred_region
          %623 = dma.done [#allocation6], 128
        $region96: #{tpu_custom_call.1} parent=83 // pred_fallthru
          _
        %s624 = sand.u32 %s42, 1
        %s625 = scalar_lea.sflag [#allocation9], %s624
        %s626 = sand.u32 %s118, 1
        %s627 = smul.addr %s626, 8
        %s628 = scalar_lea.vmem [#allocation8], %s627
        // Predicated region
        $region97: #{tpu_custom_call.1} parent=83 // pred_check
          %p629 = pneg %p131
        $region98: #{tpu_custom_call.1} parent=83 // pred_check_branch
          %631 = sbr.rel (%p629) target = $region100
        $region99: #{tpu_custom_call.1} parent=83 // pred_region
          %632 = dma.done %s625, 128
        $region100: #{tpu_custom_call.1} parent=83 // pred_fallthru
          _
        %s633 = sand.u32 %s42, 1
        %s634 = scalar_lea.sflag [#allocation9], %s633
        %s635 = sand.u32 %s144, 1
        %s636 = smul.addr %s635, 8
        %s637 = scalar_lea.vmem [#allocation10], %s636
        // Predicated region
        $region101: #{tpu_custom_call.1} parent=83 // pred_check
          %p638 = pneg %p157
        $region102: #{tpu_custom_call.1} parent=83 // pred_check_branch
          %640 = sbr.rel (%p638) target = $region104
        $region103: #{tpu_custom_call.1} parent=83 // pred_region
          %641 = dma.done %s634, 128
        $region104: #{tpu_custom_call.1} parent=83 // pred_fallthru
          _
        %s642 = sand.u32 %s42, 1
        %s643 = scalar_lea.sflag [#allocation12], %s642
        %s644 = sand.u32 %s170, 1
        %s645 = smul.addr %s644, 8
        %s646 = scalar_lea.vmem [#allocation11], %s645
        // Predicated region
        $region105: #{tpu_custom_call.1} parent=83 // pred_check
          %p647 = pneg %p183
        $region106: #{tpu_custom_call.1} parent=83 // pred_check_branch
          %649 = sbr.rel (%p647) target = $region108
        $region107: #{tpu_custom_call.1} parent=83 // pred_region
          %650 = dma.done %s643, 128
        $region108: #{tpu_custom_call.1} parent=83 // pred_fallthru
          _
        // Predicated region
        $region109: #{tpu_custom_call.1} parent=83 // pred_check
          %p651 = pneg %p204
        $region110: #{tpu_custom_call.1} parent=83 // pred_check_branch
          %653 = sbr.rel (%p651) target = $region112
        $region111: #{tpu_custom_call.1} parent=83 // pred_region
          %654 = dma.done [#allocation12], 512
        $region112: #{tpu_custom_call.1} parent=83 // pred_fallthru
          _
        // Predicated region
        $region113: #{tpu_custom_call.1} parent=83 // pred_check
          %p655 = pneg %p225
        $region114: #{tpu_custom_call.1} parent=83 // pred_check_branch
          %657 = sbr.rel (%p655) target = $region116
        $region115: #{tpu_custom_call.1} parent=83 // pred_region
          %658 = dma.done [#allocation15], 512
        $region116: #{tpu_custom_call.1} parent=83 // pred_fallthru
          _
        // Predicated region
        $region117: #{tpu_custom_call.1} parent=83 // pred_check
          %p659 = pneg %p246
        $region118: #{tpu_custom_call.1} parent=83 // pred_check_branch
          %661 = sbr.rel (%p659) target = $region120
        $region119: #{tpu_custom_call.1} parent=83 // pred_region
          %662 = dma.done [#allocation15], 512
        $region120: #{tpu_custom_call.1} parent=83 // pred_fallthru
          _
        // Predicated region
        $region121: #{tpu_custom_call.1} parent=83 // pred_check
          %p663 = pneg %p330
        $region122: #{tpu_custom_call.1} parent=83 // pred_check_branch
          %665 = sbr.rel (%p663) target = $region124
        $region123: #{tpu_custom_call.1} parent=83 // pred_region
          %666 = dma.done [#allocation18], 512
        $region124: #{tpu_custom_call.1} parent=83 // pred_fallthru
          _
        %s667 = sand.u32 %s50, 1
        %s668 = scalar_lea.sflag [#allocation3], %s667
        %s669 = sand.u32 %s50, 1
        %s670 = scalar_lea.vmem [#allocation2], %s669
        %p671 = pneg %p63
        %p672 = pneg %p60
        %p673 = pneg %p84
        %p674 = pneg %p81
        %p675 = pneg %p105
        %p676 = pneg %p102
        %s677 = sand.u32 %s42, 1
        %s678 = scalar_lea.sflag [#allocation9], %s677
        %s679 = sand.u32 %s118, 1
        %s680 = smul.addr %s679, 8
        %s681 = scalar_lea.vmem [#allocation8], %s680
        %p682 = pneg %p131
        %p683 = pneg %p128
        %s684 = sand.u32 %s42, 1
        %s685 = scalar_lea.sflag [#allocation9], %s684
        %s686 = sand.u32 %s144, 1
        %s687 = smul.addr %s686, 8
        %s688 = scalar_lea.vmem [#allocation10], %s687
        %p689 = pneg %p157
        %p690 = pneg %p154
        %s691 = sand.u32 %s42, 1
        %s692 = scalar_lea.sflag [#allocation12], %s691
        %s693 = sand.u32 %s170, 1
        %s694 = smul.addr %s693, 8
        %s695 = scalar_lea.vmem [#allocation11], %s694
        %p696 = pneg %p183
        %p697 = pneg %p180
        %p698 = pneg %p204
        %p699 = pneg %p201
        %p700 = pneg %p225
        %p701 = pneg %p222
        %p702 = pneg %p246
        %p703 = pneg %p243
        %p704 = pneg %p267
        %p705 = pneg %p264
        %p706 = pneg %p288
        %p707 = pneg %p285
        %p708 = pneg %p309
        %p709 = pneg %p306
        %p710 = pneg %p330
        %p711 = pneg %p327
        %p712 = pneg %p351
        %p713 = pneg %p348
        %p714 = pneg %p372
        %p715 = pneg %p369
        %p716 = pneg %p393
        %p717 = pneg %p390
        %p718 = pneg %p419
        %p719 = pneg %p416
        %s720 = sand.u32 %s406, 1
        %s721 = scalar_lea.sflag [#allocation4], %s720
        %s722 = sand.u32 %s406, 1
        %s723 = smul.addr %s722, 8
        %s724 = scalar_lea.vmem [#allocation19], %s723
        %v725 = vld [vmem:[%s628] sm:$0xff]
        %v726 = vld [vmem:[%s637] sm:$0xff]
        %v727 = vld [vmem:[%s646] sm:$0xff]
        %v728 = vld [vmem:[#allocation13] sm:$0xff]
        %v729 = vld [vmem:[#allocation13 + $0x8] sm:$0xff]
        %v730 = vld [vmem:[#allocation13 + $0x10] sm:$0xff]
        %v731 = vld [vmem:[#allocation13 + $0x18] sm:$0xff]
        %vm732 = vcmask 261120
        %v734 = vsel %vm732, %v725, 0
        %736 = vmatprep.subr.mxu0 0.0
        %737 = vmatpush1.msra.mxu0 %v728
        %738 = vmatprep.subr.mxu0 0.0
        %739 = vmatpush1.msra.mxu0 %v729
        %740 = vmatprep.subr.mxu0 0.0
        %741 = vmatpush1.msra.mxu0 %v730
        %742 = vmatprep.subr.mxu0 0.0
        %743 = vmatpush1.msra.mxu0 %v731
        %744 = vmatprep.subr.mxu0 0.0
        %745 = vmatpush1.msra.mxu0 0.0
        %746 = vmatprep.subr.mxu0 0.0
        %747 = vmatpush1.msra.mxu0 0.0
        %748 = vmatprep.subr.mxu0 0.0
        %749 = vmatpush1.msra.mxu0 0.0
        %750 = vmatprep.subr.mxu0 0.0
        %751 = vmatpush1.msra.mxu0 0.0
        %752 = vmatprep.subr.mxu0 0.0
        %753 = vmatpush1.msra.mxu0 0.0
        %754 = vmatprep.subr.mxu0 0.0
        %755 = vmatpush1.msra.mxu0 0.0
        %756 = vmatprep.subr.mxu0 0.0
        %757 = vmatpush1.msra.mxu0 0.0
        %758 = vmatprep.subr.mxu0 0.0
        %759 = vmatpush1.msra.mxu0 0.0
        %760 = vmatprep.subr.mxu0 0.0
        %761 = vmatpush1.msra.mxu0 0.0
        %762 = vmatprep.subr.mxu0 0.0
        %763 = vmatpush1.msra.mxu0 0.0
        %764 = vmatprep.subr.mxu0 0.0
        %765 = vmatpush1.msra.mxu0 0.0
        %766 = vmatprep.subr.mxu0 0.0
        %767 = vmatpush1.msra.mxu0 0.0
        %768 = vmatprep.subr.mxu0 0.0
        %769 = vmatpush1.msra.mxu0 0.0
        %770 = vmatprep.subr.mxu0 0.0
        %771 = vmatpush1.msra.mxu0 0.0
        %772 = vmatprep.subr.mxu0 0.0
        %773 = vmatpush1.msra.mxu0 0.0
        %774 = vmatprep.subr.mxu0 0.0
        %775 = vmatpush1.msra.mxu0 0.0
        %776 = vmatprep.subr.mxu0 0.0
        %777 = vmatpush1.msra.mxu0 0.0
        %778 = vmatprep.subr.mxu0 0.0
        %779 = vmatpush1.msra.mxu0 0.0
        %780 = vmatprep.subr.mxu0 0.0
        %781 = vmatpush1.msra.mxu0 0.0
        %782 = vmatprep.subr.mxu0 0.0
        %783 = vmatpush1.msra.mxu0 0.0
        %784 = vmatprep.subr.mxu0 0.0
        %785 = vmatpush1.msra.mxu0 0.0
        %786 = vmatprep.subr.mxu0 0.0
        %787 = vmatpush1.msra.mxu0 0.0
        %788 = vmatprep.subr.mxu0 0.0
        %789 = vmatpush1.msra.mxu0 0.0
        %790 = vmatprep.subr.mxu0 0.0
        %791 = vmatpush1.msra.mxu0 0.0
        %792 = vmatprep.subr.mxu0 0.0
        %793 = vmatpush1.msra.mxu0 0.0
        %794 = vmatprep.subr.mxu0 0.0
        %795 = vmatpush1.msra.mxu0 0.0
        %796 = vmatprep.subr.mxu0 0.0
        %797 = vmatpush1.msra.mxu0 0.0
        %798 = vmatprep.subr.mxu0 0.0
        %799 = vmatpush1.msra.mxu0 0.0
        %800 = vmatprep.mubr.f32.mxu0 0.0
        %801 = vmatmul.mubr.f32.gmra.mrb[0].mxu0 %v734
        %v802 = vpop.f32.mrb[0].mxu0
        %v803 = vadd.f32 0.0, %v802
        %v804 = vpop.f32.mrb[0].mxu0
        %805 = vdwg.mxu0
        %v806 = vld [vmem:[#allocation14] sm:$0xff]
        %v807 = vld [vmem:[#allocation14 + $0x8] sm:$0xff]
        %v808 = vld [vmem:[#allocation14 + $0x10] sm:$0xff]
        %v809 = vld [vmem:[#allocation14 + $0x18] sm:$0xff]
        %v811 = vsel %vm732, %v726, 0
        %813 = vmatprep.subr.mxu0 0.0
        %814 = vmatpush1.msra.mxu0 %v806
        %815 = vmatprep.subr.mxu0 0.0
        %816 = vmatpush1.msra.mxu0 %v807
        %817 = vmatprep.subr.mxu0 0.0
        %818 = vmatpush1.msra.mxu0 %v808
        %819 = vmatprep.subr.mxu0 0.0
        %820 = vmatpush1.msra.mxu0 %v809
        %821 = vmatprep.subr.mxu0 0.0
        %822 = vmatpush1.msra.mxu0 0.0
        %823 = vmatprep.subr.mxu0 0.0
        %824 = vmatpush1.msra.mxu0 0.0
        %825 = vmatprep.subr.mxu0 0.0
        %826 = vmatpush1.msra.mxu0 0.0
        %827 = vmatprep.subr.mxu0 0.0
        %828 = vmatpush1.msra.mxu0 0.0
        %829 = vmatprep.subr.mxu0 0.0
        %830 = vmatpush1.msra.mxu0 0.0
        %831 = vmatprep.subr.mxu0 0.0
        %832 = vmatpush1.msra.mxu0 0.0
        %833 = vmatprep.subr.mxu0 0.0
        %834 = vmatpush1.msra.mxu0 0.0
        %835 = vmatprep.subr.mxu0 0.0
        %836 = vmatpush1.msra.mxu0 0.0
        %837 = vmatprep.subr.mxu0 0.0
        %838 = vmatpush1.msra.mxu0 0.0
        %839 = vmatprep.subr.mxu0 0.0
        %840 = vmatpush1.msra.mxu0 0.0
        %841 = vmatprep.subr.mxu0 0.0
        %842 = vmatpush1.msra.mxu0 0.0
        %843 = vmatprep.subr.mxu0 0.0
        %844 = vmatpush1.msra.mxu0 0.0
        %845 = vmatprep.subr.mxu0 0.0
        %846 = vmatpush1.msra.mxu0 0.0
        %847 = vmatprep.subr.mxu0 0.0
        %848 = vmatpush1.msra.mxu0 0.0
        %849 = vmatprep.subr.mxu0 0.0
        %850 = vmatpush1.msra.mxu0 0.0
        %851 = vmatprep.subr.mxu0 0.0
        %852 = vmatpush1.msra.mxu0 0.0
        %853 = vmatprep.subr.mxu0 0.0
        %854 = vmatpush1.msra.mxu0 0.0
        %855 = vmatprep.subr.mxu0 0.0
        %856 = vmatpush1.msra.mxu0 0.0
        %857 = vmatprep.subr.mxu0 0.0
        %858 = vmatpush1.msra.mxu0 0.0
        %859 = vmatprep.subr.mxu0 0.0
        %860 = vmatpush1.msra.mxu0 0.0
        %861 = vmatprep.subr.mxu0 0.0
        %862 = vmatpush1.msra.mxu0 0.0
        %863 = vmatprep.subr.mxu0 0.0
        %864 = vmatpush1.msra.mxu0 0.0
        %865 = vmatprep.subr.mxu0 0.0
        %866 = vmatpush1.msra.mxu0 0.0
        %867 = vmatprep.subr.mxu0 0.0
        %868 = vmatpush1.msra.mxu0 0.0
        %869 = vmatprep.subr.mxu0 0.0
        %870 = vmatpush1.msra.mxu0 0.0
        %871 = vmatprep.subr.mxu0 0.0
        %872 = vmatpush1.msra.mxu0 0.0
        %873 = vmatprep.subr.mxu0 0.0
        %874 = vmatpush1.msra.mxu0 0.0
        %875 = vmatprep.subr.mxu0 0.0
        %876 = vmatpush1.msra.mxu0 0.0
        %877 = vmatprep.mubr.f32.mxu0 0.0
        %878 = vmatmul.mubr.f32.gmra.mrb[0].mxu0 %v811
        %v879 = vpop.f32.mrb[0].mxu0
        %v880 = vadd.f32 0.0, %v879
        %v881 = vpop.f32.mrb[0].mxu0
        %882 = vdwg.mxu0
        %v883 = vld [vmem:[#allocation16] sm:$0xff]
        %v884 = vld [vmem:[#allocation16 + $0x8] sm:$0xff]
        %v885 = vld [vmem:[#allocation16 + $0x10] sm:$0xff]
        %v886 = vld [vmem:[#allocation16 + $0x18] sm:$0xff]
        %v888 = vsel %vm732, %v727, 0
        %890 = vmatprep.subr.mxu0 0.0
        %891 = vmatpush1.msra.mxu0 %v883
        %892 = vmatprep.subr.mxu0 0.0
        %893 = vmatpush1.msra.mxu0 %v884
        %894 = vmatprep.subr.mxu0 0.0
        %895 = vmatpush1.msra.mxu0 %v885
        %896 = vmatprep.subr.mxu0 0.0
        %897 = vmatpush1.msra.mxu0 %v886
        %898 = vmatprep.subr.mxu0 0.0
        %899 = vmatpush1.msra.mxu0 0.0
        %900 = vmatprep.subr.mxu0 0.0
        %901 = vmatpush1.msra.mxu0 0.0
        %902 = vmatprep.subr.mxu0 0.0
        %903 = vmatpush1.msra.mxu0 0.0
        %904 = vmatprep.subr.mxu0 0.0
        %905 = vmatpush1.msra.mxu0 0.0
        %906 = vmatprep.subr.mxu0 0.0
        %907 = vmatpush1.msra.mxu0 0.0
        %908 = vmatprep.subr.mxu0 0.0
        %909 = vmatpush1.msra.mxu0 0.0
        %910 = vmatprep.subr.mxu0 0.0
        %911 = vmatpush1.msra.mxu0 0.0
        %912 = vmatprep.subr.mxu0 0.0
        %913 = vmatpush1.msra.mxu0 0.0
        %914 = vmatprep.subr.mxu0 0.0
        %915 = vmatpush1.msra.mxu0 0.0
        %916 = vmatprep.subr.mxu0 0.0
        %917 = vmatpush1.msra.mxu0 0.0
        %918 = vmatprep.subr.mxu0 0.0
        %919 = vmatpush1.msra.mxu0 0.0
        %920 = vmatprep.subr.mxu0 0.0
        %921 = vmatpush1.msra.mxu0 0.0
        %922 = vmatprep.subr.mxu0 0.0
        %923 = vmatpush1.msra.mxu0 0.0
        %924 = vmatprep.subr.mxu0 0.0
        %925 = vmatpush1.msra.mxu0 0.0
        %926 = vmatprep.subr.mxu0 0.0
        %927 = vmatpush1.msra.mxu0 0.0
        %928 = vmatprep.subr.mxu0 0.0
        %929 = vmatpush1.msra.mxu0 0.0
        %930 = vmatprep.subr.mxu0 0.0
        %931 = vmatpush1.msra.mxu0 0.0
        %932 = vmatprep.subr.mxu0 0.0
        %933 = vmatpush1.msra.mxu0 0.0
        %934 = vmatprep.subr.mxu0 0.0
        %935 = vmatpush1.msra.mxu0 0.0
        %936 = vmatprep.subr.mxu0 0.0
        %937 = vmatpush1.msra.mxu0 0.0
        %938 = vmatprep.subr.mxu0 0.0
        %939 = vmatpush1.msra.mxu0 0.0
        %940 = vmatprep.subr.mxu0 0.0
        %941 = vmatpush1.msra.mxu0 0.0
        %942 = vmatprep.subr.mxu0 0.0
        %943 = vmatpush1.msra.mxu0 0.0
        %944 = vmatprep.subr.mxu0 0.0
        %945 = vmatpush1.msra.mxu0 0.0
        %946 = vmatprep.subr.mxu0 0.0
        %947 = vmatpush1.msra.mxu0 0.0
        %948 = vmatprep.subr.mxu0 0.0
        %949 = vmatpush1.msra.mxu0 0.0
        %950 = vmatprep.subr.mxu0 0.0
        %951 = vmatpush1.msra.mxu0 0.0
        %952 = vmatprep.subr.mxu0 0.0
        %953 = vmatpush1.msra.mxu0 0.0
        %954 = vmatprep.mubr.f32.mxu0 0.0
        %955 = vmatmul.mubr.f32.gmra.mrb[0].mxu0 %v888
        %v956 = vpop.f32.mrb[0].mxu0
        %v957 = vadd.f32 0.0, %v956
        %v958 = vpop.f32.mrb[0].mxu0
        %959 = vdwg.mxu0
        %v960 = vld [vmem:[%s9] sm:$0xff]
        %v961 = vld [vmem:[%s9 + $0x8] sm:$0xff]
        %v962 = vld [vmem:[%s9 + $0x10] sm:$0xff]
        %v963 = vld [vmem:[%s9 + $0x18] sm:$0xff]
        %v964 = vld [vmem:[%s10] sm:$0x1]
        %v965 = vld [vmem:[%s11] sm:$0x1]
        %v967 = vsel %vm732, %v803, 0
        %969 = vmatprep.subr.mxu0 0.0
        %970 = vmatpush1.msra.mxu0 %v960
        %971 = vmatprep.subr.mxu0 0.0
        %972 = vmatpush1.msra.mxu0 %v961
        %973 = vmatprep.subr.mxu0 0.0
        %974 = vmatpush1.msra.mxu0 %v962
        %975 = vmatprep.subr.mxu0 0.0
        %976 = vmatpush1.msra.mxu0 %v963
        %977 = vmatprep.subr.mxu0 0.0
        %978 = vmatpush1.msra.mxu0 0.0
        %979 = vmatprep.subr.mxu0 0.0
        %980 = vmatpush1.msra.mxu0 0.0
        %981 = vmatprep.subr.mxu0 0.0
        %982 = vmatpush1.msra.mxu0 0.0
        %983 = vmatprep.subr.mxu0 0.0
        %984 = vmatpush1.msra.mxu0 0.0
        %985 = vmatprep.subr.mxu0 0.0
        %986 = vmatpush1.msra.mxu0 0.0
        %987 = vmatprep.subr.mxu0 0.0
        %988 = vmatpush1.msra.mxu0 0.0
        %989 = vmatprep.subr.mxu0 0.0
        %990 = vmatpush1.msra.mxu0 0.0
        %991 = vmatprep.subr.mxu0 0.0
        %992 = vmatpush1.msra.mxu0 0.0
        %993 = vmatprep.subr.mxu0 0.0
        %994 = vmatpush1.msra.mxu0 0.0
        %995 = vmatprep.subr.mxu0 0.0
        %996 = vmatpush1.msra.mxu0 0.0
        %997 = vmatprep.subr.mxu0 0.0
        %998 = vmatpush1.msra.mxu0 0.0
        %999 = vmatprep.subr.mxu0 0.0
        %1000 = vmatpush1.msra.mxu0 0.0
        %1001 = vmatprep.subr.mxu0 0.0
        %1002 = vmatpush1.msra.mxu0 0.0
        %1003 = vmatprep.subr.mxu0 0.0
        %1004 = vmatpush1.msra.mxu0 0.0
        %1005 = vmatprep.subr.mxu0 0.0
        %1006 = vmatpush1.msra.mxu0 0.0
        %1007 = vmatprep.subr.mxu0 0.0
        %1008 = vmatpush1.msra.mxu0 0.0
        %1009 = vmatprep.subr.mxu0 0.0
        %1010 = vmatpush1.msra.mxu0 0.0
        %1011 = vmatprep.subr.mxu0 0.0
        %1012 = vmatpush1.msra.mxu0 0.0
        %1013 = vmatprep.subr.mxu0 0.0
        %1014 = vmatpush1.msra.mxu0 0.0
        %1015 = vmatprep.subr.mxu0 0.0
        %1016 = vmatpush1.msra.mxu0 0.0
        %1017 = vmatprep.subr.mxu0 0.0
        %1018 = vmatpush1.msra.mxu0 0.0
        %1019 = vmatprep.subr.mxu0 0.0
        %1020 = vmatpush1.msra.mxu0 0.0
        %1021 = vmatprep.subr.mxu0 0.0
        %1022 = vmatpush1.msra.mxu0 0.0
        %1023 = vmatprep.subr.mxu0 0.0
        %1024 = vmatpush1.msra.mxu0 0.0
        %1025 = vmatprep.subr.mxu0 0.0
        %1026 = vmatpush1.msra.mxu0 0.0
        %1027 = vmatprep.subr.mxu0 0.0
        %1028 = vmatpush1.msra.mxu0 0.0
        %1029 = vmatprep.subr.mxu0 0.0
        %1030 = vmatpush1.msra.mxu0 0.0
        %1031 = vmatprep.subr.mxu0 0.0
        %1032 = vmatpush1.msra.mxu0 0.0
        %1033 = vmatprep.mubr.f32.mxu0 0.0
        %1034 = vmatmul.mubr.f32.gmra.mrb[0].mxu0 %v967
        %v1035 = vpop.f32.mrb[0].mxu0
        %v1036 = vadd.f32 0.0, %v1035
        %v1037 = vpop.f32.mrb[0].mxu0
        %1038 = vdwg.mxu0
        %v1039 = vsub.f32 %v803, %v1036
        %v1040 = vmul.f32 %v1039, %v1039
        %v1042 = vsel %vm732, %v1040, 0
        %1044 = vmatprep.subr.mxu0 0.0
        %1045 = vmatpush1.msra.mxu0 %v960
        %1046 = vmatprep.subr.mxu0 0.0
        %1047 = vmatpush1.msra.mxu0 %v961
        %1048 = vmatprep.subr.mxu0 0.0
        %1049 = vmatpush1.msra.mxu0 %v962
        %1050 = vmatprep.subr.mxu0 0.0
        %1051 = vmatpush1.msra.mxu0 %v963
        %1052 = vmatprep.subr.mxu0 0.0
        %1053 = vmatpush1.msra.mxu0 0.0
        %1054 = vmatprep.subr.mxu0 0.0
        %1055 = vmatpush1.msra.mxu0 0.0
        %1056 = vmatprep.subr.mxu0 0.0
        %1057 = vmatpush1.msra.mxu0 0.0
        %1058 = vmatprep.subr.mxu0 0.0
        %1059 = vmatpush1.msra.mxu0 0.0
        %1060 = vmatprep.subr.mxu0 0.0
        %1061 = vmatpush1.msra.mxu0 0.0
        %1062 = vmatprep.subr.mxu0 0.0
        %1063 = vmatpush1.msra.mxu0 0.0
        %1064 = vmatprep.subr.mxu0 0.0
        %1065 = vmatpush1.msra.mxu0 0.0
        %1066 = vmatprep.subr.mxu0 0.0
        %1067 = vmatpush1.msra.mxu0 0.0
        %1068 = vmatprep.subr.mxu0 0.0
        %1069 = vmatpush1.msra.mxu0 0.0
        %1070 = vmatprep.subr.mxu0 0.0
        %1071 = vmatpush1.msra.mxu0 0.0
        %1072 = vmatprep.subr.mxu0 0.0
        %1073 = vmatpush1.msra.mxu0 0.0
        %1074 = vmatprep.subr.mxu0 0.0
        %1075 = vmatpush1.msra.mxu0 0.0
        %1076 = vmatprep.subr.mxu0 0.0
        %1077 = vmatpush1.msra.mxu0 0.0
        %1078 = vmatprep.subr.mxu0 0.0
        %1079 = vmatpush1.msra.mxu0 0.0
        %1080 = vmatprep.subr.mxu0 0.0
        %1081 = vmatpush1.msra.mxu0 0.0
        %1082 = vmatprep.subr.mxu0 0.0
        %1083 = vmatpush1.msra.mxu0 0.0
        %1084 = vmatprep.subr.mxu0 0.0
        %1085 = vmatpush1.msra.mxu0 0.0
        %1086 = vmatprep.subr.mxu0 0.0
        %1087 = vmatpush1.msra.mxu0 0.0
        %1088 = vmatprep.subr.mxu0 0.0
        %1089 = vmatpush1.msra.mxu0 0.0
        %1090 = vmatprep.subr.mxu0 0.0
        %1091 = vmatpush1.msra.mxu0 0.0
        %1092 = vmatprep.subr.mxu0 0.0
        %1093 = vmatpush1.msra.mxu0 0.0
        %1094 = vmatprep.subr.mxu0 0.0
        %1095 = vmatpush1.msra.mxu0 0.0
        %1096 = vmatprep.subr.mxu0 0.0
        %1097 = vmatpush1.msra.mxu0 0.0
        %1098 = vmatprep.subr.mxu0 0.0
        %1099 = vmatpush1.msra.mxu0 0.0
        %1100 = vmatprep.subr.mxu0 0.0
        %1101 = vmatpush1.msra.mxu0 0.0
        %1102 = vmatprep.subr.mxu0 0.0
        %1103 = vmatpush1.msra.mxu0 0.0
        %1104 = vmatprep.subr.mxu0 0.0
        %1105 = vmatpush1.msra.mxu0 0.0
        %1106 = vmatprep.subr.mxu0 0.0
        %1107 = vmatpush1.msra.mxu0 0.0
        %1108 = vmatprep.mubr.f32.mxu0 0.0
        %1109 = vmatmul.mubr.f32.gmra.mrb[0].mxu0 %v1042
        %v1110 = vpop.f32.mrb[0].mxu0
        %v1111 = vadd.f32 1e-05, %v1110
        %v1112 = vpop.f32.mrb[0].mxu0
        %1113 = vdwg.mxu0
        %v1114 = vrsqrt.pop %v1111
        %v1115 = vmul.f32 %v1039, %v1114
        %v1117 = vlaneseq
        %v1118 = vshrl.u32 %v1117, 7
        %v1119 = vsub.s32 0, %v1118
        %v1120 = vrot.slane %v964, %v1119
        %v1122 = vmul.f32 %v1115, %v1120
        %v1124 = vlaneseq
        %v1125 = vshrl.u32 %v1124, 7
        %v1126 = vsub.s32 0, %v1125
        %v1127 = vrot.slane %v965, %v1126
        %v1129 = vadd.f32 %v1122, %v1127
        %v1131 = vsel %vm732, %v880, 0
        %1133 = vmatprep.subr.mxu0 0.0
        %1134 = vmatpush1.msra.mxu0 %v960
        %1135 = vmatprep.subr.mxu0 0.0
        %1136 = vmatpush1.msra.mxu0 %v961
        %1137 = vmatprep.subr.mxu0 0.0
        %1138 = vmatpush1.msra.mxu0 %v962
        %1139 = vmatprep.subr.mxu0 0.0
        %1140 = vmatpush1.msra.mxu0 %v963
        %1141 = vmatprep.subr.mxu0 0.0
        %1142 = vmatpush1.msra.mxu0 0.0
        %1143 = vmatprep.subr.mxu0 0.0
        %1144 = vmatpush1.msra.mxu0 0.0
        %1145 = vmatprep.subr.mxu0 0.0
        %1146 = vmatpush1.msra.mxu0 0.0
        %1147 = vmatprep.subr.mxu0 0.0
        %1148 = vmatpush1.msra.mxu0 0.0
        %1149 = vmatprep.subr.mxu0 0.0
        %1150 = vmatpush1.msra.mxu0 0.0
        %1151 = vmatprep.subr.mxu0 0.0
        %1152 = vmatpush1.msra.mxu0 0.0
        %1153 = vmatprep.subr.mxu0 0.0
        %1154 = vmatpush1.msra.mxu0 0.0
        %1155 = vmatprep.subr.mxu0 0.0
        %1156 = vmatpush1.msra.mxu0 0.0
        %1157 = vmatprep.subr.mxu0 0.0
        %1158 = vmatpush1.msra.mxu0 0.0
        %1159 = vmatprep.subr.mxu0 0.0
        %1160 = vmatpush1.msra.mxu0 0.0
        %1161 = vmatprep.subr.mxu0 0.0
        %1162 = vmatpush1.msra.mxu0 0.0
        %1163 = vmatprep.subr.mxu0 0.0
        %1164 = vmatpush1.msra.mxu0 0.0
        %1165 = vmatprep.subr.mxu0 0.0
        %1166 = vmatpush1.msra.mxu0 0.0
        %1167 = vmatprep.subr.mxu0 0.0
        %1168 = vmatpush1.msra.mxu0 0.0
        %1169 = vmatprep.subr.mxu0 0.0
        %1170 = vmatpush1.msra.mxu0 0.0
        %1171 = vmatprep.subr.mxu0 0.0
        %1172 = vmatpush1.msra.mxu0 0.0
        %1173 = vmatprep.subr.mxu0 0.0
        %1174 = vmatpush1.msra.mxu0 0.0
        %1175 = vmatprep.subr.mxu0 0.0
        %1176 = vmatpush1.msra.mxu0 0.0
        %1177 = vmatprep.subr.mxu0 0.0
        %1178 = vmatpush1.msra.mxu0 0.0
        %1179 = vmatprep.subr.mxu0 0.0
        %1180 = vmatpush1.msra.mxu0 0.0
        %1181 = vmatprep.subr.mxu0 0.0
        %1182 = vmatpush1.msra.mxu0 0.0
        %1183 = vmatprep.subr.mxu0 0.0
        %1184 = vmatpush1.msra.mxu0 0.0
        %1185 = vmatprep.subr.mxu0 0.0
        %1186 = vmatpush1.msra.mxu0 0.0
        %1187 = vmatprep.subr.mxu0 0.0
        %1188 = vmatpush1.msra.mxu0 0.0
        %1189 = vmatprep.subr.mxu0 0.0
        %1190 = vmatpush1.msra.mxu0 0.0
        %1191 = vmatprep.subr.mxu0 0.0
        %1192 = vmatpush1.msra.mxu0 0.0
        %1193 = vmatprep.subr.mxu0 0.0
        %1194 = vmatpush1.msra.mxu0 0.0
        %1195 = vmatprep.subr.mxu0 0.0
        %1196 = vmatpush1.msra.mxu0 0.0
        %1197 = vmatprep.mubr.f32.mxu0 0.0
        %1198 = vmatmul.mubr.f32.gmra.mrb[0].mxu0 %v1131
        %v1199 = vpop.f32.mrb[0].mxu0
        %v1200 = vadd.f32 0.0, %v1199
        %v1201 = vpop.f32.mrb[0].mxu0
        %1202 = vdwg.mxu0
        %v1203 = vsub.f32 %v880, %v1200
        %v1204 = vmul.f32 %v1203, %v1203
        %v1206 = vsel %vm732, %v1204, 0
        %1208 = vmatprep.subr.mxu0 0.0
        %1209 = vmatpush1.msra.mxu0 %v960
        %1210 = vmatprep.subr.mxu0 0.0
        %1211 = vmatpush1.msra.mxu0 %v961
        %1212 = vmatprep.subr.mxu0 0.0
        %1213 = vmatpush1.msra.mxu0 %v962
        %1214 = vmatprep.subr.mxu0 0.0
        %1215 = vmatpush1.msra.mxu0 %v963
        %1216 = vmatprep.subr.mxu0 0.0
        %1217 = vmatpush1.msra.mxu0 0.0
        %1218 = vmatprep.subr.mxu0 0.0
        %1219 = vmatpush1.msra.mxu0 0.0
        %1220 = vmatprep.subr.mxu0 0.0
        %1221 = vmatpush1.msra.mxu0 0.0
        %1222 = vmatprep.subr.mxu0 0.0
        %1223 = vmatpush1.msra.mxu0 0.0
        %1224 = vmatprep.subr.mxu0 0.0
        %1225 = vmatpush1.msra.mxu0 0.0
        %1226 = vmatprep.subr.mxu0 0.0
        %1227 = vmatpush1.msra.mxu0 0.0
        %1228 = vmatprep.subr.mxu0 0.0
        %1229 = vmatpush1.msra.mxu0 0.0
        %1230 = vmatprep.subr.mxu0 0.0
        %1231 = vmatpush1.msra.mxu0 0.0
        %1232 = vmatprep.subr.mxu0 0.0
        %1233 = vmatpush1.msra.mxu0 0.0
        %1234 = vmatprep.subr.mxu0 0.0
        %1235 = vmatpush1.msra.mxu0 0.0
        %1236 = vmatprep.subr.mxu0 0.0
        %1237 = vmatpush1.msra.mxu0 0.0
        %1238 = vmatprep.subr.mxu0 0.0
        %1239 = vmatpush1.msra.mxu0 0.0
        %1240 = vmatprep.subr.mxu0 0.0
        %1241 = vmatpush1.msra.mxu0 0.0
        %1242 = vmatprep.subr.mxu0 0.0
        %1243 = vmatpush1.msra.mxu0 0.0
        %1244 = vmatprep.subr.mxu0 0.0
        %1245 = vmatpush1.msra.mxu0 0.0
        %1246 = vmatprep.subr.mxu0 0.0
        %1247 = vmatpush1.msra.mxu0 0.0
        %1248 = vmatprep.subr.mxu0 0.0
        %1249 = vmatpush1.msra.mxu0 0.0
        %1250 = vmatprep.subr.mxu0 0.0
        %1251 = vmatpush1.msra.mxu0 0.0
        %1252 = vmatprep.subr.mxu0 0.0
        %1253 = vmatpush1.msra.mxu0 0.0
        %1254 = vmatprep.subr.mxu0 0.0
        %1255 = vmatpush1.msra.mxu0 0.0
        %1256 = vmatprep.subr.mxu0 0.0
        %1257 = vmatpush1.msra.mxu0 0.0
        %1258 = vmatprep.subr.mxu0 0.0
        %1259 = vmatpush1.msra.mxu0 0.0
        %1260 = vmatprep.subr.mxu0 0.0
        %1261 = vmatpush1.msra.mxu0 0.0
        %1262 = vmatprep.subr.mxu0 0.0
        %1263 = vmatpush1.msra.mxu0 0.0
        %1264 = vmatprep.subr.mxu0 0.0
        %1265 = vmatpush1.msra.mxu0 0.0
        %1266 = vmatprep.subr.mxu0 0.0
        %1267 = vmatpush1.msra.mxu0 0.0
        %1268 = vmatprep.subr.mxu0 0.0
        %1269 = vmatpush1.msra.mxu0 0.0
        %1270 = vmatprep.subr.mxu0 0.0
        %1271 = vmatpush1.msra.mxu0 0.0
        %1272 = vmatprep.mubr.f32.mxu0 0.0
        %1273 = vmatmul.mubr.f32.gmra.mrb[0].mxu0 %v1206
        %v1274 = vpop.f32.mrb[0].mxu0
        %v1275 = vadd.f32 1e-05, %v1274
        %v1276 = vpop.f32.mrb[0].mxu0
        %1277 = vdwg.mxu0
        %v1278 = vrsqrt.pop %v1275
        %v1279 = vmul.f32 %v1203, %v1278
        %v1280 = vmul.f32 %v1279, %v1120
        %v1281 = vadd.f32 %v1280, %v1127
        %v1283 = vsel %vm732, %v957, 0
        %1285 = vmatprep.subr.mxu0 0.0
        %1286 = vmatpush1.msra.mxu0 %v960
        %1287 = vmatprep.subr.mxu0 0.0
        %1288 = vmatpush1.msra.mxu0 %v961
        %1289 = vmatprep.subr.mxu0 0.0
        %1290 = vmatpush1.msra.mxu0 %v962
        %1291 = vmatprep.subr.mxu0 0.0
        %1292 = vmatpush1.msra.mxu0 %v963
        %1293 = vmatprep.subr.mxu0 0.0
        %1294 = vmatpush1.msra.mxu0 0.0
        %1295 = vmatprep.subr.mxu0 0.0
        %1296 = vmatpush1.msra.mxu0 0.0
        %1297 = vmatprep.subr.mxu0 0.0
        %1298 = vmatpush1.msra.mxu0 0.0
        %1299 = vmatprep.subr.mxu0 0.0
        %1300 = vmatpush1.msra.mxu0 0.0
        %1301 = vmatprep.subr.mxu0 0.0
        %1302 = vmatpush1.msra.mxu0 0.0
        %1303 = vmatprep.subr.mxu0 0.0
        %1304 = vmatpush1.msra.mxu0 0.0
        %1305 = vmatprep.subr.mxu0 0.0
        %1306 = vmatpush1.msra.mxu0 0.0
        %1307 = vmatprep.subr.mxu0 0.0
        %1308 = vmatpush1.msra.mxu0 0.0
        %1309 = vmatprep.subr.mxu0 0.0
        %1310 = vmatpush1.msra.mxu0 0.0
        %1311 = vmatprep.subr.mxu0 0.0
        %1312 = vmatpush1.msra.mxu0 0.0
        %1313 = vmatprep.subr.mxu0 0.0
        %1314 = vmatpush1.msra.mxu0 0.0
        %1315 = vmatprep.subr.mxu0 0.0
        %1316 = vmatpush1.msra.mxu0 0.0
        %1317 = vmatprep.subr.mxu0 0.0
        %1318 = vmatpush1.msra.mxu0 0.0
        %1319 = vmatprep.subr.mxu0 0.0
        %1320 = vmatpush1.msra.mxu0 0.0
        %1321 = vmatprep.subr.mxu0 0.0
        %1322 = vmatpush1.msra.mxu0 0.0
        %1323 = vmatprep.subr.mxu0 0.0
        %1324 = vmatpush1.msra.mxu0 0.0
        %1325 = vmatprep.subr.mxu0 0.0
        %1326 = vmatpush1.msra.mxu0 0.0
        %1327 = vmatprep.subr.mxu0 0.0
        %1328 = vmatpush1.msra.mxu0 0.0
        %1329 = vmatprep.subr.mxu0 0.0
        %1330 = vmatpush1.msra.mxu0 0.0
        %1331 = vmatprep.subr.mxu0 0.0
        %1332 = vmatpush1.msra.mxu0 0.0
        %1333 = vmatprep.subr.mxu0 0.0
        %1334 = vmatpush1.msra.mxu0 0.0
        %1335 = vmatprep.subr.mxu0 0.0
        %1336 = vmatpush1.msra.mxu0 0.0
        %1337 = vmatprep.subr.mxu0 0.0
        %1338 = vmatpush1.msra.mxu0 0.0
        %1339 = vmatprep.subr.mxu0 0.0
        %1340 = vmatpush1.msra.mxu0 0.0
        %1341 = vmatprep.subr.mxu0 0.0
        %1342 = vmatpush1.msra.mxu0 0.0
        %1343 = vmatprep.subr.mxu0 0.0
        %1344 = vmatpush1.msra.mxu0 0.0
        %1345 = vmatprep.subr.mxu0 0.0
        %1346 = vmatpush1.msra.mxu0 0.0
        %1347 = vmatprep.subr.mxu0 0.0
        %1348 = vmatpush1.msra.mxu0 0.0
        %1349 = vmatprep.mubr.f32.mxu0 0.0
        %1350 = vmatmul.mubr.f32.gmra.mrb[0].mxu0 %v1283
        %v1351 = vpop.f32.mrb[0].mxu0
        %v1352 = vadd.f32 0.0, %v1351
        %v1353 = vpop.f32.mrb[0].mxu0
        %1354 = vdwg.mxu0
        %v1355 = vsub.f32 %v957, %v1352
        %v1356 = vmul.f32 %v1355, %v1355
        %v1358 = vsel %vm732, %v1356, 0
        %1360 = vmatprep.subr.mxu0 0.0
        %1361 = vmatpush1.msra.mxu0 %v960
        %1362 = vmatprep.subr.mxu0 0.0
        %1363 = vmatpush1.msra.mxu0 %v961
        %1364 = vmatprep.subr.mxu0 0.0
        %1365 = vmatpush1.msra.mxu0 %v962
        %1366 = vmatprep.subr.mxu0 0.0
        %1367 = vmatpush1.msra.mxu0 %v963
        %1368 = vmatprep.subr.mxu0 0.0
        %1369 = vmatpush1.msra.mxu0 0.0
        %1370 = vmatprep.subr.mxu0 0.0
        %1371 = vmatpush1.msra.mxu0 0.0
        %1372 = vmatprep.subr.mxu0 0.0
        %1373 = vmatpush1.msra.mxu0 0.0
        %1374 = vmatprep.subr.mxu0 0.0
        %1375 = vmatpush1.msra.mxu0 0.0
        %1376 = vmatprep.subr.mxu0 0.0
        %1377 = vmatpush1.msra.mxu0 0.0
        %1378 = vmatprep.subr.mxu0 0.0
        %1379 = vmatpush1.msra.mxu0 0.0
        %1380 = vmatprep.subr.mxu0 0.0
        %1381 = vmatpush1.msra.mxu0 0.0
        %1382 = vmatprep.subr.mxu0 0.0
        %1383 = vmatpush1.msra.mxu0 0.0
        %1384 = vmatprep.subr.mxu0 0.0
        %1385 = vmatpush1.msra.mxu0 0.0
        %1386 = vmatprep.subr.mxu0 0.0
        %1387 = vmatpush1.msra.mxu0 0.0
        %1388 = vmatprep.subr.mxu0 0.0
        %1389 = vmatpush1.msra.mxu0 0.0
        %1390 = vmatprep.subr.mxu0 0.0
        %1391 = vmatpush1.msra.mxu0 0.0
        %1392 = vmatprep.subr.mxu0 0.0
        %1393 = vmatpush1.msra.mxu0 0.0
        %1394 = vmatprep.subr.mxu0 0.0
        %1395 = vmatpush1.msra.mxu0 0.0
        %1396 = vmatprep.subr.mxu0 0.0
        %1397 = vmatpush1.msra.mxu0 0.0
        %1398 = vmatprep.subr.mxu0 0.0
        %1399 = vmatpush1.msra.mxu0 0.0
        %1400 = vmatprep.subr.mxu0 0.0
        %1401 = vmatpush1.msra.mxu0 0.0
        %1402 = vmatprep.subr.mxu0 0.0
        %1403 = vmatpush1.msra.mxu0 0.0
        %1404 = vmatprep.subr.mxu0 0.0
        %1405 = vmatpush1.msra.mxu0 0.0
        %1406 = vmatprep.subr.mxu0 0.0
        %1407 = vmatpush1.msra.mxu0 0.0
        %1408 = vmatprep.subr.mxu0 0.0
        %1409 = vmatpush1.msra.mxu0 0.0
        %1410 = vmatprep.subr.mxu0 0.0
        %1411 = vmatpush1.msra.mxu0 0.0
        %1412 = vmatprep.subr.mxu0 0.0
        %1413 = vmatpush1.msra.mxu0 0.0
        %1414 = vmatprep.subr.mxu0 0.0
        %1415 = vmatpush1.msra.mxu0 0.0
        %1416 = vmatprep.subr.mxu0 0.0
        %1417 = vmatpush1.msra.mxu0 0.0
        %1418 = vmatprep.subr.mxu0 0.0
        %1419 = vmatpush1.msra.mxu0 0.0
        %1420 = vmatprep.subr.mxu0 0.0
        %1421 = vmatpush1.msra.mxu0 0.0
        %1422 = vmatprep.subr.mxu0 0.0
        %1423 = vmatpush1.msra.mxu0 0.0
        %1424 = vmatprep.mubr.f32.mxu0 0.0
        %1425 = vmatmul.mubr.f32.gmra.mrb[0].mxu0 %v1358
        %v1426 = vpop.f32.mrb[0].mxu0
        %v1427 = vadd.f32 1e-05, %v1426
        %v1428 = vpop.f32.mrb[0].mxu0
        %1429 = vdwg.mxu0
        %v1430 = vrsqrt.pop %v1427
        %v1431 = vmul.f32 %v1355, %v1430
        %v1432 = vmul.f32 %v1431, %v1120
        %v1433 = vadd.f32 %v1432, %v1127
        %v1434 = vld [vmem:[#allocation5] sm:$0xff]
        %v1435 = vld [vmem:[#allocation7] sm:$0xff]
        %v1436 = vld [vmem:[%s611] sm:$0x1]
        %v1438 = vlaneseq
        %v1439 = vshrl.u32 %v1438, 7
        %v1440 = vsub.s32 0, %v1439
        %v1441 = vrot.slane %v1436, %v1440
        %1443 = vxpose.xlu0.b32.start [1/16] %v1441, 128
        %1444 = vxpose.xlu0.b32.cont [2/16] 0.0, 128
        %1445 = vxpose.xlu0.b32.cont [3/16] 0.0, 128
        %1446 = vxpose.xlu0.b32.cont [4/16] 0.0, 128
        %1447 = vxpose.xlu0.b32.cont [5/16] 0.0, 128
        %1448 = vxpose.xlu0.b32.cont [6/16] 0.0, 128
        %1449 = vxpose.xlu0.b32.cont [7/16] 0.0, 128
        %1450 = vxpose.xlu0.b32.cont [8/16] 0.0, 128
        %1451 = vxpose.xlu0.b32.cont [9/16] 0.0, 128
        %1452 = vxpose.xlu0.b32.cont [10/16] 0.0, 128
        %1453 = vxpose.xlu0.b32.cont [11/16] 0.0, 128
        %1454 = vxpose.xlu0.b32.cont [12/16] 0.0, 128
        %1455 = vxpose.xlu0.b32.cont [13/16] 0.0, 128
        %1456 = vxpose.xlu0.b32.cont [14/16] 0.0, 128
        %1457 = vxpose.xlu0.b32.cont [15/16] 0.0, 128
        %1458 = vxpose.xlu0.b32.end [16/16] 0.0, 128
        %v1459 = vpop.trf.xlu0
        %v1460 = vpop.trf.xlu0
        %v1461 = vpop.trf.xlu0
        %v1462 = vpop.trf.xlu0
        %v1463 = vpop.trf.xlu0
        %v1464 = vpop.trf.xlu0
        %v1465 = vpop.trf.xlu0
        %v1466 = vpop.trf.xlu0
        %v1467 = vpop.trf.xlu0
        %v1468 = vpop.trf.xlu0
        %v1469 = vpop.trf.xlu0
        %v1470 = vpop.trf.xlu0
        %v1471 = vpop.trf.xlu0
        %v1472 = vpop.trf.xlu0
        %v1473 = vpop.trf.xlu0
        %v1474 = vpop.trf.xlu0
        %v1475 = vmul.f32 %v1441, %v1459
        %v1476 = vmul.f32 %v1475, %v1434
        %vm1477 = vcmask 64512
        %v1479 = vsel %vm1477, %v1129, 0
        %v1482 = vsel %vm1477, %v1281, 0
        %1484 = vmatprep.subr.mxu0 0.0
        %1485 = vmatpush1.xpose.msra.mxu0 %v1482
        %1486 = vmatprep.subr.mxu0 0.0
        %1487 = vmatpush1.xpose.msra.mxu0 0.0
        %1488 = vmatprep.subr.mxu0 0.0
        %1489 = vmatpush1.xpose.msra.mxu0 0.0
        %1490 = vmatprep.subr.mxu0 0.0
        %1491 = vmatpush1.xpose.msra.mxu0 0.0
        %1492 = vmatprep.subr.mxu0 0.0
        %1493 = vmatpush1.xpose.msra.mxu0 0.0
        %1494 = vmatprep.subr.mxu0 0.0
        %1495 = vmatpush1.xpose.msra.mxu0 0.0
        %1496 = vmatprep.subr.mxu0 0.0
        %1497 = vmatpush1.xpose.msra.mxu0 0.0
        %1498 = vmatprep.subr.mxu0 0.0
        %1499 = vmatpush1.xpose.msra.mxu0 0.0
        %1500 = vmatprep.subr.mxu0 0.0
        %1501 = vmatpush1.xpose.msra.mxu0 0.0
        %1502 = vmatprep.subr.mxu0 0.0
        %1503 = vmatpush1.xpose.msra.mxu0 0.0
        %1504 = vmatprep.subr.mxu0 0.0
        %1505 = vmatpush1.xpose.msra.mxu0 0.0
        %1506 = vmatprep.subr.mxu0 0.0
        %1507 = vmatpush1.xpose.msra.mxu0 0.0
        %1508 = vmatprep.subr.mxu0 0.0
        %1509 = vmatpush1.xpose.msra.mxu0 0.0
        %1510 = vmatprep.subr.mxu0 0.0
        %1511 = vmatpush1.xpose.msra.mxu0 0.0
        %1512 = vmatprep.subr.mxu0 0.0
        %1513 = vmatpush1.xpose.msra.mxu0 0.0
        %1514 = vmatprep.subr.mxu0 0.0
        %1515 = vmatpush1.xpose.msra.mxu0 0.0
        %1516 = vmatprep.subr.mxu0 0.0
        %1517 = vmatpush1.xpose.msra.mxu0 0.0
        %1518 = vmatprep.subr.mxu0 0.0
        %1519 = vmatpush1.xpose.msra.mxu0 0.0
        %1520 = vmatprep.subr.mxu0 0.0
        %1521 = vmatpush1.xpose.msra.mxu0 0.0
        %1522 = vmatprep.subr.mxu0 0.0
        %1523 = vmatpush1.xpose.msra.mxu0 0.0
        %1524 = vmatprep.subr.mxu0 0.0
        %1525 = vmatpush1.xpose.msra.mxu0 0.0
        %1526 = vmatprep.subr.mxu0 0.0
        %1527 = vmatpush1.xpose.msra.mxu0 0.0
        %1528 = vmatprep.subr.mxu0 0.0
        %1529 = vmatpush1.xpose.msra.mxu0 0.0
        %1530 = vmatprep.subr.mxu0 0.0
        %1531 = vmatpush1.xpose.msra.mxu0 0.0
        %1532 = vmatprep.subr.mxu0 0.0
        %1533 = vmatpush1.xpose.msra.mxu0 0.0
        %1534 = vmatprep.subr.mxu0 0.0
        %1535 = vmatpush1.xpose.msra.mxu0 0.0
        %1536 = vmatprep.subr.mxu0 0.0
        %1537 = vmatpush1.xpose.msra.mxu0 0.0
        %1538 = vmatprep.subr.mxu0 0.0
        %1539 = vmatpush1.xpose.msra.mxu0 0.0
        %1540 = vmatprep.subr.mxu0 0.0
        %1541 = vmatpush1.xpose.msra.mxu0 0.0
        %1542 = vmatprep.subr.mxu0 0.0
        %1543 = vmatpush1.xpose.msra.mxu0 0.0
        %1544 = vmatprep.subr.mxu0 0.0
        %1545 = vmatpush1.xpose.msra.mxu0 0.0
        %1546 = vmatprep.subr.mxu0 0.0
        %1547 = vmatpush1.xpose.msra.mxu0 0.0
        %1548 = vmatprep.mubr.f32.mxu0 0.0
        %1549 = vmatmul.mubr.f32.gmra.mrb[0].mxu0 %v1479
        %v1550 = vpop.f32.mrb[0].mxu0
        %v1551 = vadd.f32 0.0, %v1550
        %v1552 = vpop.f32.mrb[0].mxu0
        %1553 = vdwg.mxu0
        %v1554 = vmul.f32 %v1551, 0.17677669
        %v1555 = vadd.f32 %v1554, %v1435
        %v1556 = vmul.f32 %v1555, %v1476
        %v1557 = vsel %vm1477, %v1556, -inf
        %1558 = vmax.xlane.f32.xlu0 %v1557
        %v1559 = vpop.xlane.xlu0 %1558
        %v1560 = vsub.f32 %v1556, %v1559
        %v1561 = vmul.f32 %v1560, 1.442695
        %v1562 = vpow.pop %v1561
        %v1563 = vmul.f32 %v1562, %v1476
        %v1564 = vsel %vm1477, %v1563, 0.0
        %1565 = vadd.xlane.f32.xlu0 %v1564
        %v1566 = vpop.xlane.xlu0 %1565
        %vm1567 = vcmp.eq.f32.partialorder %v1566, 0.0
        %v1568 = vsel %vm1567, 1, 0
        %v1569 = vcvt.s32.f32 %v1568
        %v1570 = vadd.f32 %v1566, %v1569
        %v1571 = vadd.f32 %v1570, 1e-20
        %v1572 = vrcp.pop %v1571
        %v1573 = vmul.f32 %v1563, %v1572
        %v1575 = vsel %vm1477, %v1573, 0
        %1577 = vmatprep.subr.mxu0 0.0
        %1578 = vmatpush1.msra.mxu0 %v1433
        %1579 = vmatprep.subr.mxu0 0.0
        %1580 = vmatpush1.msra.mxu0 0.0
        %1581 = vmatprep.subr.mxu0 0.0
        %1582 = vmatpush1.msra.mxu0 0.0
        %1583 = vmatprep.subr.mxu0 0.0
        %1584 = vmatpush1.msra.mxu0 0.0
        %1585 = vmatprep.subr.mxu0 0.0
        %1586 = vmatpush1.msra.mxu0 0.0
        %1587 = vmatprep.subr.mxu0 0.0
        %1588 = vmatpush1.msra.mxu0 0.0
        %1589 = vmatprep.subr.mxu0 0.0
        %1590 = vmatpush1.msra.mxu0 0.0
        %1591 = vmatprep.subr.mxu0 0.0
        %1592 = vmatpush1.msra.mxu0 0.0
        %1593 = vmatprep.subr.mxu0 0.0
        %1594 = vmatpush1.msra.mxu0 0.0
        %1595 = vmatprep.subr.mxu0 0.0
        %1596 = vmatpush1.msra.mxu0 0.0
        %1597 = vmatprep.subr.mxu0 0.0
        %1598 = vmatpush1.msra.mxu0 0.0
        %1599 = vmatprep.subr.mxu0 0.0
        %1600 = vmatpush1.msra.mxu0 0.0
        %1601 = vmatprep.subr.mxu0 0.0
        %1602 = vmatpush1.msra.mxu0 0.0
        %1603 = vmatprep.subr.mxu0 0.0
        %1604 = vmatpush1.msra.mxu0 0.0
        %1605 = vmatprep.subr.mxu0 0.0
        %1606 = vmatpush1.msra.mxu0 0.0
        %1607 = vmatprep.subr.mxu0 0.0
        %1608 = vmatpush1.msra.mxu0 0.0
        %1609 = vmatprep.subr.mxu0 0.0
        %1610 = vmatpush1.msra.mxu0 0.0
        %1611 = vmatprep.subr.mxu0 0.0
        %1612 = vmatpush1.msra.mxu0 0.0
        %1613 = vmatprep.subr.mxu0 0.0
        %1614 = vmatpush1.msra.mxu0 0.0
        %1615 = vmatprep.subr.mxu0 0.0
        %1616 = vmatpush1.msra.mxu0 0.0
        %1617 = vmatprep.subr.mxu0 0.0
        %1618 = vmatpush1.msra.mxu0 0.0
        %1619 = vmatprep.subr.mxu0 0.0
        %1620 = vmatpush1.msra.mxu0 0.0
        %1621 = vmatprep.subr.mxu0 0.0
        %1622 = vmatpush1.msra.mxu0 0.0
        %1623 = vmatprep.subr.mxu0 0.0
        %1624 = vmatpush1.msra.mxu0 0.0
        %1625 = vmatprep.subr.mxu0 0.0
        %1626 = vmatpush1.msra.mxu0 0.0
        %1627 = vmatprep.subr.mxu0 0.0
        %1628 = vmatpush1.msra.mxu0 0.0
        %1629 = vmatprep.subr.mxu0 0.0
        %1630 = vmatpush1.msra.mxu0 0.0
        %1631 = vmatprep.subr.mxu0 0.0
        %1632 = vmatpush1.msra.mxu0 0.0
        %1633 = vmatprep.subr.mxu0 0.0
        %1634 = vmatpush1.msra.mxu0 0.0
        %1635 = vmatprep.subr.mxu0 0.0
        %1636 = vmatpush1.msra.mxu0 0.0
        %1637 = vmatprep.subr.mxu0 0.0
        %1638 = vmatpush1.msra.mxu0 0.0
        %1639 = vmatprep.subr.mxu0 0.0
        %1640 = vmatpush1.msra.mxu0 0.0
        %1641 = vmatprep.mubr.f32.mxu0 0.0
        %1642 = vmatmul.mubr.f32.gmra.mrb[0].mxu0 %v1575
        %v1643 = vpop.f32.mrb[0].mxu0
        %v1644 = vadd.f32 0.0, %v1643
        %v1645 = vpop.f32.mrb[0].mxu0
        %1646 = vdwg.mxu0
        %1647 = vrot.lane.b32.xlu0 %v1129, 120
        %v1648 = vpop.permute.xlu0 %1647
        %1649 = vrot.lane.b32.xlu0 %v1281, 120
        %v1650 = vpop.permute.xlu0 %1649
        %v1651 = vsel %vm1477, %v1648, 0
        %v1653 = vsel %vm1477, %v1650, 0
        %1655 = vmatprep.subr.mxu0 0.0
        %1656 = vmatpush1.xpose.msra.mxu0 %v1653
        %1657 = vmatprep.subr.mxu0 0.0
        %1658 = vmatpush1.xpose.msra.mxu0 0.0
        %1659 = vmatprep.subr.mxu0 0.0
        %1660 = vmatpush1.xpose.msra.mxu0 0.0
        %1661 = vmatprep.subr.mxu0 0.0
        %1662 = vmatpush1.xpose.msra.mxu0 0.0
        %1663 = vmatprep.subr.mxu0 0.0
        %1664 = vmatpush1.xpose.msra.mxu0 0.0
        %1665 = vmatprep.subr.mxu0 0.0
        %1666 = vmatpush1.xpose.msra.mxu0 0.0
        %1667 = vmatprep.subr.mxu0 0.0
        %1668 = vmatpush1.xpose.msra.mxu0 0.0
        %1669 = vmatprep.subr.mxu0 0.0
        %1670 = vmatpush1.xpose.msra.mxu0 0.0
        %1671 = vmatprep.subr.mxu0 0.0
        %1672 = vmatpush1.xpose.msra.mxu0 0.0
        %1673 = vmatprep.subr.mxu0 0.0
        %1674 = vmatpush1.xpose.msra.mxu0 0.0
        %1675 = vmatprep.subr.mxu0 0.0
        %1676 = vmatpush1.xpose.msra.mxu0 0.0
        %1677 = vmatprep.subr.mxu0 0.0
        %1678 = vmatpush1.xpose.msra.mxu0 0.0
        %1679 = vmatprep.subr.mxu0 0.0
        %1680 = vmatpush1.xpose.msra.mxu0 0.0
        %1681 = vmatprep.subr.mxu0 0.0
        %1682 = vmatpush1.xpose.msra.mxu0 0.0
        %1683 = vmatprep.subr.mxu0 0.0
        %1684 = vmatpush1.xpose.msra.mxu0 0.0
        %1685 = vmatprep.subr.mxu0 0.0
        %1686 = vmatpush1.xpose.msra.mxu0 0.0
        %1687 = vmatprep.subr.mxu0 0.0
        %1688 = vmatpush1.xpose.msra.mxu0 0.0
        %1689 = vmatprep.subr.mxu0 0.0
        %1690 = vmatpush1.xpose.msra.mxu0 0.0
        %1691 = vmatprep.subr.mxu0 0.0
        %1692 = vmatpush1.xpose.msra.mxu0 0.0
        %1693 = vmatprep.subr.mxu0 0.0
        %1694 = vmatpush1.xpose.msra.mxu0 0.0
        %1695 = vmatprep.subr.mxu0 0.0
        %1696 = vmatpush1.xpose.msra.mxu0 0.0
        %1697 = vmatprep.subr.mxu0 0.0
        %1698 = vmatpush1.xpose.msra.mxu0 0.0
        %1699 = vmatprep.subr.mxu0 0.0
        %1700 = vmatpush1.xpose.msra.mxu0 0.0
        %1701 = vmatprep.subr.mxu0 0.0
        %1702 = vmatpush1.xpose.msra.mxu0 0.0
        %1703 = vmatprep.subr.mxu0 0.0
        %1704 = vmatpush1.xpose.msra.mxu0 0.0
        %1705 = vmatprep.subr.mxu0 0.0
        %1706 = vmatpush1.xpose.msra.mxu0 0.0
        %1707 = vmatprep.subr.mxu0 0.0
        %1708 = vmatpush1.xpose.msra.mxu0 0.0
        %1709 = vmatprep.subr.mxu0 0.0
        %1710 = vmatpush1.xpose.msra.mxu0 0.0
        %1711 = vmatprep.subr.mxu0 0.0
        %1712 = vmatpush1.xpose.msra.mxu0 0.0
        %1713 = vmatprep.subr.mxu0 0.0
        %1714 = vmatpush1.xpose.msra.mxu0 0.0
        %1715 = vmatprep.subr.mxu0 0.0
        %1716 = vmatpush1.xpose.msra.mxu0 0.0
        %1717 = vmatprep.subr.mxu0 0.0
        %1718 = vmatpush1.xpose.msra.mxu0 0.0
        %1719 = vmatprep.mubr.f32.mxu0 0.0
        %1720 = vmatmul.mubr.f32.gmra.mrb[0].mxu0 %v1651
        %v1721 = vpop.f32.mrb[0].mxu0
        %v1722 = vadd.f32 0.0, %v1721
        %v1723 = vpop.f32.mrb[0].mxu0
        %1724 = vdwg.mxu0
        %v1725 = vmul.f32 %v1722, 0.17677669
        %v1726 = vadd.f32 %v1725, %v1435
        %v1727 = vmul.f32 %v1726, %v1476
        %v1728 = vsel %vm1477, %v1727, -inf
        %1729 = vmax.xlane.f32.xlu0 %v1728
        %v1730 = vpop.xlane.xlu0 %1729
        %v1731 = vsub.f32 %v1727, %v1730
        %v1732 = vmul.f32 %v1731, 1.442695
        %v1733 = vpow.pop %v1732
        %v1734 = vmul.f32 %v1733, %v1476
        %v1735 = vsel %vm1477, %v1734, 0.0
        %1736 = vadd.xlane.f32.xlu0 %v1735
        %v1737 = vpop.xlane.xlu0 %1736
        %vm1738 = vcmp.eq.f32.partialorder %v1737, 0.0
        %v1739 = vsel %vm1738, 1, 0
        %v1740 = vcvt.s32.f32 %v1739
        %v1741 = vadd.f32 %v1737, %v1740
        %v1742 = vadd.f32 %v1741, 1e-20
        %v1743 = vrcp.pop %v1742
        %v1744 = vmul.f32 %v1734, %v1743
        %1746 = vrot.lane.b32.xlu0 %v1433, 120
        %v1747 = vpop.permute.xlu0 %1746
        %v1750 = vsel %vm1477, %v1744, 0
        %1752 = vmatprep.subr.mxu0 0.0
        %1753 = vmatpush1.msra.mxu0 %v1747
        %1754 = vmatprep.subr.mxu0 0.0
        %1755 = vmatpush1.msra.mxu0 0.0
        %1756 = vmatprep.subr.mxu0 0.0
        %1757 = vmatpush1.msra.mxu0 0.0
        %1758 = vmatprep.subr.mxu0 0.0
        %1759 = vmatpush1.msra.mxu0 0.0
        %1760 = vmatprep.subr.mxu0 0.0
        %1761 = vmatpush1.msra.mxu0 0.0
        %1762 = vmatprep.subr.mxu0 0.0
        %1763 = vmatpush1.msra.mxu0 0.0
        %1764 = vmatprep.subr.mxu0 0.0
        %1765 = vmatpush1.msra.mxu0 0.0
        %1766 = vmatprep.subr.mxu0 0.0
        %1767 = vmatpush1.msra.mxu0 0.0
        %1768 = vmatprep.subr.mxu0 0.0
        %1769 = vmatpush1.msra.mxu0 0.0
        %1770 = vmatprep.subr.mxu0 0.0
        %1771 = vmatpush1.msra.mxu0 0.0
        %1772 = vmatprep.subr.mxu0 0.0
        %1773 = vmatpush1.msra.mxu0 0.0
        %1774 = vmatprep.subr.mxu0 0.0
        %1775 = vmatpush1.msra.mxu0 0.0
        %1776 = vmatprep.subr.mxu0 0.0
        %1777 = vmatpush1.msra.mxu0 0.0
        %1778 = vmatprep.subr.mxu0 0.0
        %1779 = vmatpush1.msra.mxu0 0.0
        %1780 = vmatprep.subr.mxu0 0.0
        %1781 = vmatpush1.msra.mxu0 0.0
        %1782 = vmatprep.subr.mxu0 0.0
        %1783 = vmatpush1.msra.mxu0 0.0
        %1784 = vmatprep.subr.mxu0 0.0
        %1785 = vmatpush1.msra.mxu0 0.0
        %1786 = vmatprep.subr.mxu0 0.0
        %1787 = vmatpush1.msra.mxu0 0.0
        %1788 = vmatprep.subr.mxu0 0.0
        %1789 = vmatpush1.msra.mxu0 0.0
        %1790 = vmatprep.subr.mxu0 0.0
        %1791 = vmatpush1.msra.mxu0 0.0
        %1792 = vmatprep.subr.mxu0 0.0
        %1793 = vmatpush1.msra.mxu0 0.0
        %1794 = vmatprep.subr.mxu0 0.0
        %1795 = vmatpush1.msra.mxu0 0.0
        %1796 = vmatprep.subr.mxu0 0.0
        %1797 = vmatpush1.msra.mxu0 0.0
        %1798 = vmatprep.subr.mxu0 0.0
        %1799 = vmatpush1.msra.mxu0 0.0
        %1800 = vmatprep.subr.mxu0 0.0
        %1801 = vmatpush1.msra.mxu0 0.0
        %1802 = vmatprep.subr.mxu0 0.0
        %1803 = vmatpush1.msra.mxu0 0.0
        %1804 = vmatprep.subr.mxu0 0.0
        %1805 = vmatpush1.msra.mxu0 0.0
        %1806 = vmatprep.subr.mxu0 0.0
        %1807 = vmatpush1.msra.mxu0 0.0
        %1808 = vmatprep.subr.mxu0 0.0
        %1809 = vmatpush1.msra.mxu0 0.0
        %1810 = vmatprep.subr.mxu0 0.0
        %1811 = vmatpush1.msra.mxu0 0.0
        %1812 = vmatprep.subr.mxu0 0.0
        %1813 = vmatpush1.msra.mxu0 0.0
        %1814 = vmatprep.subr.mxu0 0.0
        %1815 = vmatpush1.msra.mxu0 0.0
        %1816 = vmatprep.mubr.f32.mxu0 0.0
        %1817 = vmatmul.mubr.f32.gmra.mrb[0].mxu0 %v1750
        %v1818 = vpop.f32.mrb[0].mxu0
        %v1819 = vadd.f32 0.0, %v1818
        %v1820 = vpop.f32.mrb[0].mxu0
        %1821 = vdwg.mxu0
        %1822 = vrot.lane.b32.xlu0 %v1129, 112
        %v1823 = vpop.permute.xlu0 %1822
        %1824 = vrot.lane.b32.xlu0 %v1281, 112
        %v1825 = vpop.permute.xlu0 %1824
        %v1826 = vsel %vm1477, %v1823, 0
        %v1828 = vsel %vm1477, %v1825, 0
        %1830 = vmatprep.subr.mxu0 0.0
        %1831 = vmatpush1.xpose.msra.mxu0 %v1828
        %1832 = vmatprep.subr.mxu0 0.0
        %1833 = vmatpush1.xpose.msra.mxu0 0.0
        %1834 = vmatprep.subr.mxu0 0.0
        %1835 = vmatpush1.xpose.msra.mxu0 0.0
        %1836 = vmatprep.subr.mxu0 0.0
        %1837 = vmatpush1.xpose.msra.mxu0 0.0
        %1838 = vmatprep.subr.mxu0 0.0
        %1839 = vmatpush1.xpose.msra.mxu0 0.0
        %1840 = vmatprep.subr.mxu0 0.0
        %1841 = vmatpush1.xpose.msra.mxu0 0.0
        %1842 = vmatprep.subr.mxu0 0.0
        %1843 = vmatpush1.xpose.msra.mxu0 0.0
        %1844 = vmatprep.subr.mxu0 0.0
        %1845 = vmatpush1.xpose.msra.mxu0 0.0
        %1846 = vmatprep.subr.mxu0 0.0
        %1847 = vmatpush1.xpose.msra.mxu0 0.0
        %1848 = vmatprep.subr.mxu0 0.0
        %1849 = vmatpush1.xpose.msra.mxu0 0.0
        %1850 = vmatprep.subr.mxu0 0.0
        %1851 = vmatpush1.xpose.msra.mxu0 0.0
        %1852 = vmatprep.subr.mxu0 0.0
        %1853 = vmatpush1.xpose.msra.mxu0 0.0
        %1854 = vmatprep.subr.mxu0 0.0
        %1855 = vmatpush1.xpose.msra.mxu0 0.0
        %1856 = vmatprep.subr.mxu0 0.0
        %1857 = vmatpush1.xpose.msra.mxu0 0.0
        %1858 = vmatprep.subr.mxu0 0.0
        %1859 = vmatpush1.xpose.msra.mxu0 0.0
        %1860 = vmatprep.subr.mxu0 0.0
        %1861 = vmatpush1.xpose.msra.mxu0 0.0
        %1862 = vmatprep.subr.mxu0 0.0
        %1863 = vmatpush1.xpose.msra.mxu0 0.0
        %1864 = vmatprep.subr.mxu0 0.0
        %1865 = vmatpush1.xpose.msra.mxu0 0.0
        %1866 = vmatprep.subr.mxu0 0.0
        %1867 = vmatpush1.xpose.msra.mxu0 0.0
        %1868 = vmatprep.subr.mxu0 0.0
        %1869 = vmatpush1.xpose.msra.mxu0 0.0
        %1870 = vmatprep.subr.mxu0 0.0
        %1871 = vmatpush1.xpose.msra.mxu0 0.0
        %1872 = vmatprep.subr.mxu0 0.0
        %1873 = vmatpush1.xpose.msra.mxu0 0.0
        %1874 = vmatprep.subr.mxu0 0.0
        %1875 = vmatpush1.xpose.msra.mxu0 0.0
        %1876 = vmatprep.subr.mxu0 0.0
        %1877 = vmatpush1.xpose.msra.mxu0 0.0
        %1878 = vmatprep.subr.mxu0 0.0
        %1879 = vmatpush1.xpose.msra.mxu0 0.0
        %1880 = vmatprep.subr.mxu0 0.0
        %1881 = vmatpush1.xpose.msra.mxu0 0.0
        %1882 = vmatprep.subr.mxu0 0.0
        %1883 = vmatpush1.xpose.msra.mxu0 0.0
        %1884 = vmatprep.subr.mxu0 0.0
        %1885 = vmatpush1.xpose.msra.mxu0 0.0
        %1886 = vmatprep.subr.mxu0 0.0
        %1887 = vmatpush1.xpose.msra.mxu0 0.0
        %1888 = vmatprep.subr.mxu0 0.0
        %1889 = vmatpush1.xpose.msra.mxu0 0.0
        %1890 = vmatprep.subr.mxu0 0.0
        %1891 = vmatpush1.xpose.msra.mxu0 0.0
        %1892 = vmatprep.subr.mxu0 0.0
        %1893 = vmatpush1.xpose.msra.mxu0 0.0
        %1894 = vmatprep.mubr.f32.mxu0 0.0
        %1895 = vmatmul.mubr.f32.gmra.mrb[0].mxu0 %v1826
        %v1896 = vpop.f32.mrb[0].mxu0
        %v1897 = vadd.f32 0.0, %v1896
        %v1898 = vpop.f32.mrb[0].mxu0
        %1899 = vdwg.mxu0
        %v1900 = vmul.f32 %v1897, 0.17677669
        %v1901 = vadd.f32 %v1900, %v1435
        %v1902 = vmul.f32 %v1901, %v1476
        %v1903 = vsel %vm1477, %v1902, -inf
        %1904 = vmax.xlane.f32.xlu0 %v1903
        %v1905 = vpop.xlane.xlu0 %1904
        %v1906 = vsub.f32 %v1902, %v1905
        %v1907 = vmul.f32 %v1906, 1.442695
        %v1908 = vpow.pop %v1907
        %v1909 = vmul.f32 %v1908, %v1476
        %v1910 = vsel %vm1477, %v1909, 0.0
        %1911 = vadd.xlane.f32.xlu0 %v1910
        %v1912 = vpop.xlane.xlu0 %1911
        %vm1913 = vcmp.eq.f32.partialorder %v1912, 0.0
        %v1914 = vsel %vm1913, 1, 0
        %v1915 = vcvt.s32.f32 %v1914
        %v1916 = vadd.f32 %v1912, %v1915
        %v1917 = vadd.f32 %v1916, 1e-20
        %v1918 = vrcp.pop %v1917
        %v1919 = vmul.f32 %v1909, %v1918
        %1920 = vrot.lane.b32.xlu0 %v1433, 112
        %v1921 = vpop.permute.xlu0 %1920
        %v1924 = vsel %vm1477, %v1919, 0
        %1926 = vmatprep.subr.mxu0 0.0
        %1927 = vmatpush1.msra.mxu0 %v1921
        %1928 = vmatprep.subr.mxu0 0.0
        %1929 = vmatpush1.msra.mxu0 0.0
        %1930 = vmatprep.subr.mxu0 0.0
        %1931 = vmatpush1.msra.mxu0 0.0
        %1932 = vmatprep.subr.mxu0 0.0
        %1933 = vmatpush1.msra.mxu0 0.0
        %1934 = vmatprep.subr.mxu0 0.0
        %1935 = vmatpush1.msra.mxu0 0.0
        %1936 = vmatprep.subr.mxu0 0.0
        %1937 = vmatpush1.msra.mxu0 0.0
        %1938 = vmatprep.subr.mxu0 0.0
        %1939 = vmatpush1.msra.mxu0 0.0
        %1940 = vmatprep.subr.mxu0 0.0
        %1941 = vmatpush1.msra.mxu0 0.0
        %1942 = vmatprep.subr.mxu0 0.0
        %1943 = vmatpush1.msra.mxu0 0.0
        %1944 = vmatprep.subr.mxu0 0.0
        %1945 = vmatpush1.msra.mxu0 0.0
        %1946 = vmatprep.subr.mxu0 0.0
        %1947 = vmatpush1.msra.mxu0 0.0
        %1948 = vmatprep.subr.mxu0 0.0
        %1949 = vmatpush1.msra.mxu0 0.0
        %1950 = vmatprep.subr.mxu0 0.0
        %1951 = vmatpush1.msra.mxu0 0.0
        %1952 = vmatprep.subr.mxu0 0.0
        %1953 = vmatpush1.msra.mxu0 0.0
        %1954 = vmatprep.subr.mxu0 0.0
        %1955 = vmatpush1.msra.mxu0 0.0
        %1956 = vmatprep.subr.mxu0 0.0
        %1957 = vmatpush1.msra.mxu0 0.0
        %1958 = vmatprep.subr.mxu0 0.0
        %1959 = vmatpush1.msra.mxu0 0.0
        %1960 = vmatprep.subr.mxu0 0.0
        %1961 = vmatpush1.msra.mxu0 0.0
        %1962 = vmatprep.subr.mxu0 0.0
        %1963 = vmatpush1.msra.mxu0 0.0
        %1964 = vmatprep.subr.mxu0 0.0
        %1965 = vmatpush1.msra.mxu0 0.0
        %1966 = vmatprep.subr.mxu0 0.0
        %1967 = vmatpush1.msra.mxu0 0.0
        %1968 = vmatprep.subr.mxu0 0.0
        %1969 = vmatpush1.msra.mxu0 0.0
        %1970 = vmatprep.subr.mxu0 0.0
        %1971 = vmatpush1.msra.mxu0 0.0
        %1972 = vmatprep.subr.mxu0 0.0
        %1973 = vmatpush1.msra.mxu0 0.0
        %1974 = vmatprep.subr.mxu0 0.0
        %1975 = vmatpush1.msra.mxu0 0.0
        %1976 = vmatprep.subr.mxu0 0.0
        %1977 = vmatpush1.msra.mxu0 0.0
        %1978 = vmatprep.subr.mxu0 0.0
        %1979 = vmatpush1.msra.mxu0 0.0
        %1980 = vmatprep.subr.mxu0 0.0
        %1981 = vmatpush1.msra.mxu0 0.0
        %1982 = vmatprep.subr.mxu0 0.0
        %1983 = vmatpush1.msra.mxu0 0.0
        %1984 = vmatprep.subr.mxu0 0.0
        %1985 = vmatpush1.msra.mxu0 0.0
        %1986 = vmatprep.subr.mxu0 0.0
        %1987 = vmatpush1.msra.mxu0 0.0
        %1988 = vmatprep.subr.mxu0 0.0
        %1989 = vmatpush1.msra.mxu0 0.0
        %1990 = vmatprep.mubr.f32.mxu0 0.0
        %1991 = vmatmul.mubr.f32.gmra.mrb[0].mxu0 %v1924
        %v1992 = vpop.f32.mrb[0].mxu0
        %v1993 = vadd.f32 0.0, %v1992
        %v1994 = vpop.f32.mrb[0].mxu0
        %1995 = vdwg.mxu0
        %1996 = vrot.lane.b32.xlu0 %v1129, 104
        %v1997 = vpop.permute.xlu0 %1996
        %1998 = vrot.lane.b32.xlu0 %v1281, 104
        %v1999 = vpop.permute.xlu0 %1998
        %v2000 = vsel %vm1477, %v1997, 0
        %v2002 = vsel %vm1477, %v1999, 0
        %2004 = vmatprep.subr.mxu0 0.0
        %2005 = vmatpush1.xpose.msra.mxu0 %v2002
        %2006 = vmatprep.subr.mxu0 0.0
        %2007 = vmatpush1.xpose.msra.mxu0 0.0
        %2008 = vmatprep.subr.mxu0 0.0
        %2009 = vmatpush1.xpose.msra.mxu0 0.0
        %2010 = vmatprep.subr.mxu0 0.0
        %2011 = vmatpush1.xpose.msra.mxu0 0.0
        %2012 = vmatprep.subr.mxu0 0.0
        %2013 = vmatpush1.xpose.msra.mxu0 0.0
        %2014 = vmatprep.subr.mxu0 0.0
        %2015 = vmatpush1.xpose.msra.mxu0 0.0
        %2016 = vmatprep.subr.mxu0 0.0
        %2017 = vmatpush1.xpose.msra.mxu0 0.0
        %2018 = vmatprep.subr.mxu0 0.0
        %2019 = vmatpush1.xpose.msra.mxu0 0.0
        %2020 = vmatprep.subr.mxu0 0.0
        %2021 = vmatpush1.xpose.msra.mxu0 0.0
        %2022 = vmatprep.subr.mxu0 0.0
        %2023 = vmatpush1.xpose.msra.mxu0 0.0
        %2024 = vmatprep.subr.mxu0 0.0
        %2025 = vmatpush1.xpose.msra.mxu0 0.0
        %2026 = vmatprep.subr.mxu0 0.0
        %2027 = vmatpush1.xpose.msra.mxu0 0.0
        %2028 = vmatprep.subr.mxu0 0.0
        %2029 = vmatpush1.xpose.msra.mxu0 0.0
        %2030 = vmatprep.subr.mxu0 0.0
        %2031 = vmatpush1.xpose.msra.mxu0 0.0
        %2032 = vmatprep.subr.mxu0 0.0
        %2033 = vmatpush1.xpose.msra.mxu0 0.0
        %2034 = vmatprep.subr.mxu0 0.0
        %2035 = vmatpush1.xpose.msra.mxu0 0.0
        %2036 = vmatprep.subr.mxu0 0.0
        %2037 = vmatpush1.xpose.msra.mxu0 0.0
        %2038 = vmatprep.subr.mxu0 0.0
        %2039 = vmatpush1.xpose.msra.mxu0 0.0
        %2040 = vmatprep.subr.mxu0 0.0
        %2041 = vmatpush1.xpose.msra.mxu0 0.0
        %2042 = vmatprep.subr.mxu0 0.0
        %2043 = vmatpush1.xpose.msra.mxu0 0.0
        %2044 = vmatprep.subr.mxu0 0.0
        %2045 = vmatpush1.xpose.msra.mxu0 0.0
        %2046 = vmatprep.subr.mxu0 0.0
        %2047 = vmatpush1.xpose.msra.mxu0 0.0
        %2048 = vmatprep.subr.mxu0 0.0
        %2049 = vmatpush1.xpose.msra.mxu0 0.0
        %2050 = vmatprep.subr.mxu0 0.0
        %2051 = vmatpush1.xpose.msra.mxu0 0.0
        %2052 = vmatprep.subr.mxu0 0.0
        %2053 = vmatpush1.xpose.msra.mxu0 0.0
        %2054 = vmatprep.subr.mxu0 0.0
        %2055 = vmatpush1.xpose.msra.mxu0 0.0
        %2056 = vmatprep.subr.mxu0 0.0
        %2057 = vmatpush1.xpose.msra.mxu0 0.0
        %2058 = vmatprep.subr.mxu0 0.0
        %2059 = vmatpush1.xpose.msra.mxu0 0.0
        %2060 = vmatprep.subr.mxu0 0.0
        %2061 = vmatpush1.xpose.msra.mxu0 0.0
        %2062 = vmatprep.subr.mxu0 0.0
        %2063 = vmatpush1.xpose.msra.mxu0 0.0
        %2064 = vmatprep.subr.mxu0 0.0
        %2065 = vmatpush1.xpose.msra.mxu0 0.0
        %2066 = vmatprep.subr.mxu0 0.0
        %2067 = vmatpush1.xpose.msra.mxu0 0.0
        %2068 = vmatprep.mubr.f32.mxu0 0.0
        %2069 = vmatmul.mubr.f32.gmra.mrb[0].mxu0 %v2000
        %v2070 = vpop.f32.mrb[0].mxu0
        %v2071 = vadd.f32 0.0, %v2070
        %v2072 = vpop.f32.mrb[0].mxu0
        %2073 = vdwg.mxu0
        %v2074 = vmul.f32 %v2071, 0.17677669
        %v2075 = vadd.f32 %v2074, %v1435
        %v2076 = vmul.f32 %v2075, %v1476
        %v2077 = vsel %vm1477, %v2076, -inf
        %2078 = vmax.xlane.f32.xlu0 %v2077
        %v2079 = vpop.xlane.xlu0 %2078
        %v2080 = vsub.f32 %v2076, %v2079
        %v2081 = vmul.f32 %v2080, 1.442695
        %v2082 = vpow.pop %v2081
        %v2083 = vmul.f32 %v2082, %v1476
        %v2084 = vsel %vm1477, %v2083, 0.0
        %2085 = vadd.xlane.f32.xlu0 %v2084
        %v2086 = vpop.xlane.xlu0 %2085
        %vm2087 = vcmp.eq.f32.partialorder %v2086, 0.0
        %v2088 = vsel %vm2087, 1, 0
        %v2089 = vcvt.s32.f32 %v2088
        %v2090 = vadd.f32 %v2086, %v2089
        %v2091 = vadd.f32 %v2090, 1e-20
        %v2092 = vrcp.pop %v2091
        %v2093 = vmul.f32 %v2083, %v2092
        %2094 = vrot.lane.b32.xlu0 %v1433, 104
        %v2095 = vpop.permute.xlu0 %2094
        %v2098 = vsel %vm1477, %v2093, 0
        %2100 = vmatprep.subr.mxu0 0.0
        %2101 = vmatpush1.msra.mxu0 %v2095
        %2102 = vmatprep.subr.mxu0 0.0
        %2103 = vmatpush1.msra.mxu0 0.0
        %2104 = vmatprep.subr.mxu0 0.0
        %2105 = vmatpush1.msra.mxu0 0.0
        %2106 = vmatprep.subr.mxu0 0.0
        %2107 = vmatpush1.msra.mxu0 0.0
        %2108 = vmatprep.subr.mxu0 0.0
        %2109 = vmatpush1.msra.mxu0 0.0
        %2110 = vmatprep.subr.mxu0 0.0
        %2111 = vmatpush1.msra.mxu0 0.0
        %2112 = vmatprep.subr.mxu0 0.0
        %2113 = vmatpush1.msra.mxu0 0.0
        %2114 = vmatprep.subr.mxu0 0.0
        %2115 = vmatpush1.msra.mxu0 0.0
        %2116 = vmatprep.subr.mxu0 0.0
        %2117 = vmatpush1.msra.mxu0 0.0
        %2118 = vmatprep.subr.mxu0 0.0
        %2119 = vmatpush1.msra.mxu0 0.0
        %2120 = vmatprep.subr.mxu0 0.0
        %2121 = vmatpush1.msra.mxu0 0.0
        %2122 = vmatprep.subr.mxu0 0.0
        %2123 = vmatpush1.msra.mxu0 0.0
        %2124 = vmatprep.subr.mxu0 0.0
        %2125 = vmatpush1.msra.mxu0 0.0
        %2126 = vmatprep.subr.mxu0 0.0
        %2127 = vmatpush1.msra.mxu0 0.0
        %2128 = vmatprep.subr.mxu0 0.0
        %2129 = vmatpush1.msra.mxu0 0.0
        %2130 = vmatprep.subr.mxu0 0.0
        %2131 = vmatpush1.msra.mxu0 0.0
        %2132 = vmatprep.subr.mxu0 0.0
        %2133 = vmatpush1.msra.mxu0 0.0
        %2134 = vmatprep.subr.mxu0 0.0
        %2135 = vmatpush1.msra.mxu0 0.0
        %2136 = vmatprep.subr.mxu0 0.0
        %2137 = vmatpush1.msra.mxu0 0.0
        %2138 = vmatprep.subr.mxu0 0.0
        %2139 = vmatpush1.msra.mxu0 0.0
        %2140 = vmatprep.subr.mxu0 0.0
        %2141 = vmatpush1.msra.mxu0 0.0
        %2142 = vmatprep.subr.mxu0 0.0
        %2143 = vmatpush1.msra.mxu0 0.0
        %2144 = vmatprep.subr.mxu0 0.0
        %2145 = vmatpush1.msra.mxu0 0.0
        %2146 = vmatprep.subr.mxu0 0.0
        %2147 = vmatpush1.msra.mxu0 0.0
        %2148 = vmatprep.subr.mxu0 0.0
        %2149 = vmatpush1.msra.mxu0 0.0
        %2150 = vmatprep.subr.mxu0 0.0
        %2151 = vmatpush1.msra.mxu0 0.0
        %2152 = vmatprep.subr.mxu0 0.0
        %2153 = vmatpush1.msra.mxu0 0.0
        %2154 = vmatprep.subr.mxu0 0.0
        %2155 = vmatpush1.msra.mxu0 0.0
        %2156 = vmatprep.subr.mxu0 0.0
        %2157 = vmatpush1.msra.mxu0 0.0
        %2158 = vmatprep.subr.mxu0 0.0
        %2159 = vmatpush1.msra.mxu0 0.0
        %2160 = vmatprep.subr.mxu0 0.0
        %2161 = vmatpush1.msra.mxu0 0.0
        %2162 = vmatprep.subr.mxu0 0.0
        %2163 = vmatpush1.msra.mxu0 0.0
        %2164 = vmatprep.mubr.f32.mxu0 0.0
        %2165 = vmatmul.mubr.f32.gmra.mrb[0].mxu0 %v2098
        %v2166 = vpop.f32.mrb[0].mxu0
        %v2167 = vadd.f32 0.0, %v2166
        %v2168 = vpop.f32.mrb[0].mxu0
        %2169 = vdwg.mxu0
        %2171 = vrot.lane.b32.xlu0 %v1819, 8
        %v2172 = vpop.permute.xlu0 %2171
        %2175 = vrot.lane.b32.xlu0 %v1993, 16
        %v2176 = vpop.permute.xlu0 %2175
        %2179 = vrot.lane.b32.xlu0 %v2167, 24
        %v2180 = vpop.permute.xlu0 %2179
        %v2182 = vsel %vm1477, %v1644, %v2172
        %vm2183 = vcmask 130048
        %v2184 = vsel %vm2183, %v2182, %v2176
        %vm2185 = vcmask 195584
        %v2186 = vsel %vm2185, %v2184, %v2180
        %v2187 = vld [vmem:[#allocation17] sm:$0xff]
        %v2188 = vld [vmem:[#allocation17 + $0x8] sm:$0xff]
        %v2189 = vld [vmem:[#allocation17 + $0x10] sm:$0xff]
        %v2190 = vld [vmem:[#allocation17 + $0x18] sm:$0xff]
        %v2191 = vld [vmem:[%s13] sm:$0x1]
        %v2193 = vlaneseq
        %v2194 = vshrl.u32 %v2193, 7
        %v2195 = vsub.s32 0, %v2194
        %v2196 = vrot.slane %v2191, %v2195
        %v2199 = vsel %vm732, %v2186, 0
        %2201 = vmatprep.subr.mxu0 0.0
        %2202 = vmatpush1.msra.mxu0 %v2187
        %2203 = vmatprep.subr.mxu0 0.0
        %2204 = vmatpush1.msra.mxu0 %v2188
        %2205 = vmatprep.subr.mxu0 0.0
        %2206 = vmatpush1.msra.mxu0 %v2189
        %2207 = vmatprep.subr.mxu0 0.0
        %2208 = vmatpush1.msra.mxu0 %v2190
        %2209 = vmatprep.subr.mxu0 0.0
        %2210 = vmatpush1.msra.mxu0 0.0
        %2211 = vmatprep.subr.mxu0 0.0
        %2212 = vmatpush1.msra.mxu0 0.0
        %2213 = vmatprep.subr.mxu0 0.0
        %2214 = vmatpush1.msra.mxu0 0.0
        %2215 = vmatprep.subr.mxu0 0.0
        %2216 = vmatpush1.msra.mxu0 0.0
        %2217 = vmatprep.subr.mxu0 0.0
        %2218 = vmatpush1.msra.mxu0 0.0
        %2219 = vmatprep.subr.mxu0 0.0
        %2220 = vmatpush1.msra.mxu0 0.0
        %2221 = vmatprep.subr.mxu0 0.0
        %2222 = vmatpush1.msra.mxu0 0.0
        %2223 = vmatprep.subr.mxu0 0.0
        %2224 = vmatpush1.msra.mxu0 0.0
        %2225 = vmatprep.subr.mxu0 0.0
        %2226 = vmatpush1.msra.mxu0 0.0
        %2227 = vmatprep.subr.mxu0 0.0
        %2228 = vmatpush1.msra.mxu0 0.0
        %2229 = vmatprep.subr.mxu0 0.0
        %2230 = vmatpush1.msra.mxu0 0.0
        %2231 = vmatprep.subr.mxu0 0.0
        %2232 = vmatpush1.msra.mxu0 0.0
        %2233 = vmatprep.subr.mxu0 0.0
        %2234 = vmatpush1.msra.mxu0 0.0
        %2235 = vmatprep.subr.mxu0 0.0
        %2236 = vmatpush1.msra.mxu0 0.0
        %2237 = vmatprep.subr.mxu0 0.0
        %2238 = vmatpush1.msra.mxu0 0.0
        %2239 = vmatprep.subr.mxu0 0.0
        %2240 = vmatpush1.msra.mxu0 0.0
        %2241 = vmatprep.subr.mxu0 0.0
        %2242 = vmatpush1.msra.mxu0 0.0
        %2243 = vmatprep.subr.mxu0 0.0
        %2244 = vmatpush1.msra.mxu0 0.0
        %2245 = vmatprep.subr.mxu0 0.0
        %2246 = vmatpush1.msra.mxu0 0.0
        %2247 = vmatprep.subr.mxu0 0.0
        %2248 = vmatpush1.msra.mxu0 0.0
        %2249 = vmatprep.subr.mxu0 0.0
        %2250 = vmatpush1.msra.mxu0 0.0
        %2251 = vmatprep.subr.mxu0 0.0
        %2252 = vmatpush1.msra.mxu0 0.0
        %2253 = vmatprep.subr.mxu0 0.0
        %2254 = vmatpush1.msra.mxu0 0.0
        %2255 = vmatprep.subr.mxu0 0.0
        %2256 = vmatpush1.msra.mxu0 0.0
        %2257 = vmatprep.subr.mxu0 0.0
        %2258 = vmatpush1.msra.mxu0 0.0
        %2259 = vmatprep.subr.mxu0 0.0
        %2260 = vmatpush1.msra.mxu0 0.0
        %2261 = vmatprep.subr.mxu0 0.0
        %2262 = vmatpush1.msra.mxu0 0.0
        %2263 = vmatprep.subr.mxu0 0.0
        %2264 = vmatpush1.msra.mxu0 0.0
        %2265 = vmatprep.mubr.f32.mxu0 0.0
        %2266 = vmatmul.mubr.f32.gmra.mrb[0].mxu0 %v2199
        %v2267 = vpop.f32.mrb[0].mxu0
        %v2268 = vadd.f32 %v2196, %v2267
        %v2269 = vpop.f32.mrb[0].mxu0
        %2270 = vdwg.mxu0
        %v2271 = vsel %vm732, %v2268, 0.0
        %2272 = vadd.xlane.f32.xlu0 %v2271
        %v2273 = vpop.xlane.xlu0 %2272
        %v2274 = vrcp.pop 32.0
        %v2275 = vmul.f32 %v2273, %v2274
        %v2276 = vsub.f32 %v2268, %v2275
        %v2277 = vmul.f32 %v2276, %v2276
        %v2278 = vsel %vm732, %v2277, 0.0
        %2279 = vadd.xlane.f32.xlu0 %v2278
        %v2280 = vpop.xlane.xlu0 %2279
        %v2281 = vmul.f32 %v2280, %v2274
        %v2282 = vadd.f32 %v2281, 1e-05
        %v2283 = vrsqrt.pop %v2282
        %v2284 = vmul.f32 %v2276, %v2283
        %v2285 = vld [vmem:[%s14] sm:$0x1]
        %v2287 = vlaneseq
        %v2288 = vshrl.u32 %v2287, 7
        %v2289 = vsub.s32 0, %v2288
        %v2290 = vrot.slane %v2285, %v2289
        %v2292 = vmul.f32 %v2284, %v2290
        %v2293 = vld [vmem:[%s15] sm:$0x1]
        %v2295 = vlaneseq
        %v2296 = vshrl.u32 %v2295, 7
        %v2297 = vsub.s32 0, %v2296
        %v2298 = vrot.slane %v2293, %v2297
        %v2300 = vadd.f32 %v2292, %v2298
        %2301 = vst.msk [vmem:[%s724] sm:$0xff] %vm732, %v2300
        %s2302 = sand.u32 %s406, 1
        %s2303 = scalar_lea.sflag [#allocation4], %s2302
        %s2304 = sand.u32 %s406, 1
        %s2305 = smul.addr %s2304, 8
        %s2306 = scalar_lea.vmem [#allocation19], %s2305
        // Predicated region
        $region125: #{tpu_custom_call.1} parent=83 // pred_check
          %p2307 = pneg %p416
        $region126: #{tpu_custom_call.1} parent=83 // pred_check_branch
          %2309 = sbr.rel (%p2307) target = $region128
        $region127: #{tpu_custom_call.1} parent=83 // pred_region
          %s2311 = ssub.s32 128, 128
          %2312 = vsyncadd %s2303, %s2311
          %s2313 = smul.addr %s42, 128
          %s2314 = scalar_lea.hbm %s16, %s2313
          %s2316 = sshll.u32 %s2306, 4
          %s2317 = int_to_ptr.vmem [resolvable:$true] %s2316
          %2319 = dma.vmem_to_hbm [thread:$0]  %s2317, 128, %s2314, %s2303
        $region128: #{tpu_custom_call.1} parent=83 // pred_fallthru
          _
      $region84: #{tpu_custom_call.1} parent=5 // pred_fallthru
        _
      %p2320 = scmp.le.s32.totalorder 2, %s37
      // Predicated region
      $region129: #{tpu_custom_call.1} parent=5 // pred_check
        %p2321 = pneg %p2320
      $region130: #{tpu_custom_call.1} parent=5 // pred_check_branch
        %2323 = sbr.rel (%p2321) target = $region132
      $region131: #{tpu_custom_call.1} parent=5 // pred_region
        %s2324 = ssub.s32 %s37, 2
        // Predicated region
        $region133: #{tpu_custom_call.1} parent=131 // pred_check
          %p2325 = pneg %p422
        $region134: #{tpu_custom_call.1} parent=131 // pred_check_branch
          %2327 = sbr.rel (%p2325) target = $region136
        $region135: #{tpu_custom_call.1} parent=131 // pred_region
          %s2328 = sand.u32 %s407, 1
          %s2329 = scalar_lea.sflag [#allocation4], %s2328
          %s2330 = sand.u32 %s407, 1
          %s2331 = smul.addr %s2330, 8
          %s2332 = scalar_lea.vmem [#allocation19], %s2331
          %2333 = dma.done %s2329, 128
        $region136: #{tpu_custom_call.1} parent=131 // pred_fallthru
          _
      $region132: #{tpu_custom_call.1} parent=5 // pred_fallthru
        _
    $region6: #{tpu_custom_call.1} parent=1 // loop_footer
      %s41 = sadd.s32 1, %s37
    $region7: #{tpu_custom_call.1} parent=1 // loop_footer_branch
      %36 = sbr.rel target = $region3
    $region8: #{tpu_custom_call.1} parent=1 // loop_exit
      _
    %2334 = vsyncpa [#allocation3], 1
    %s2335 = scalar_lea.sflag [#allocation3], 1
    %2336 = vsyncpa %s2335, 1
    %2337 = vsyncpa [#allocation6], 1
    %2338 = vsyncpa [#allocation9], 1
    %s2339 = scalar_lea.sflag [#allocation9], 1
    %2340 = vsyncpa %s2339, 1
    %2341 = vsyncpa [#allocation12], 1
    %s2342 = scalar_lea.sflag [#allocation12], 1
    %2343 = vsyncpa %s2342, 1
    %2344 = vsyncpa [#allocation15], 1
    %2345 = vsyncpa [#allocation18], 1
    %2346 = vsyncpa [#allocation4], 1
    %s2347 = scalar_lea.sflag [#allocation4], 1
    %2348 = vsyncpa %s2347, 1

</llo_original>
